<compile_context>
chip_gen: v7x
topology: tpu7x:2x2x1
jax: 0.10.0
libtpu: 0.0.40
codegen_flags: <defaults>
</compile_context>

<pallas_src>
import numpy as np

import jax
import jax.numpy as jnp
from jax import lax
from jax.experimental import pallas as pl
from jax.experimental.pallas import tpu as pltpu


def _pos_enc_kernel(q_ref, w_ref, pos_ref, out_ref):
    # q_ref:   (1, H, block_i, d_k)   queries for this (batch, edge-tile), all heads
    # w_ref:   (P, d_k)               w_rpr weight, P = max_pos + 1
    # pos_ref: (1, block_i, S)        int32 relative-position indices, already in [0, P-1]
    # out_ref: (1, H, block_i, S)
    w = w_ref[...]                       # (P, d_k)
    pos = pos_ref[0]                     # (block_i, S)
    n_heads = q_ref.shape[1]
    n_pos = w.shape[0]

    for h in range(n_heads):             # static unroll over heads (H is small)
        q_h = q_ref[0, h]                # (block_i, d_k)

        # q_dot_rpr = q @ W^T : contraction on the last dim of both operands (MXU, f32 acc,
        # no explicit transpose, no upcast of the operands).
        qdr = lax.dot_general(
            q_h, w,
            dimension_numbers=(((1,), (1,)), ((), ())),
            preferred_element_type=jnp.float32,
        )                                # (block_i, P) f32

        # Resample: out[i, j] = qdr[i, pos[i, j]], realized as an exact masked sum over the
        # small rpr axis (pure VPU work; one-hot selection of f32 values is exact).
        # TODO(synk): switch to a lane dynamic-gather when a robust Pallas primitive exists.
        acc = jnp.zeros(pos.shape, jnp.float32)
        for p in range(n_pos):           # static unroll; n_pos = max_pos + 1 is small
            acc = acc + jnp.where(pos == p, qdr[:, p:p + 1], 0.0)

        out_ref[0, h] = acc.astype(out_ref.dtype)


def _build_pos_inds(dist_matrices, batch, max_seq, max_pos):
    """Mirrors PositionalEncoding.resample_rpr_product's host-side NumPy index build."""
    seq_lens = np.array([d.shape[0] for d in dist_matrices])
    if (seq_lens == max_seq).all():
        pos_inds = np.stack([np.asarray(d) for d in dist_matrices]).astype(np.int64)
    else:
        pos_inds = np.full((batch, max_seq, max_seq), np.iinfo(np.int32).max, dtype=np.int64)
        for i_b, dist_matrix in enumerate(dist_matrices):
            n_edges = dist_matrix.shape[0]
            pos_inds[i_b, :n_edges, :n_edges] = np.asarray(dist_matrix)
    pos_inds = np.minimum(pos_inds, max_pos)      # pos_inds[pos_inds > max_pos] = max_pos
    return pos_inds.astype(np.int32)


def _pick_block_i(seq, n_heads, d_k, n_pos, itemsize, vmem_budget=8 << 20):
    """Largest edge-tile (multiple of 8 dividing seq) whose per-step working set fits."""
    def step_bytes(t):
        io = 2 * (n_heads * t * d_k + t * seq + n_heads * t * seq) * itemsize  # dbl-buffered q/pos/out
        tmp = t * n_pos * 4 + 2 * t * seq * 4                                  # qdr + acc/mask temps
        return io + tmp + 2 * n_pos * d_k * itemsize
    if step_bytes(seq) <= vmem_budget:
        return seq
    fits = [t for t in range(8, seq, 8) if seq % t == 0 and step_bytes(t) <= vmem_budget]
    return max(fits) if fits else seq


def positional_encoding(q, w_rpr, dist_matrices, *, block_i=None):
    """
    q:             [B, H, S, d_k]
    w_rpr:         [max_pos + 1, d_k]  (weight of nn.Linear(d_k, max_pos + 1, bias=False))
    dist_matrices: list of B integer arrays, each [n_edges_b, n_edges_b]
    returns:       attn_rpr [B, H, S, S]
    """
    B, H, S, d_k = q.shape
    P = w_rpr.shape[0]
    max_pos = P - 1

    # Host-side index preprocessing (operates on a python list of variable-size arrays,
    # exactly like the original module).
    pos_inds = jnp.asarray(_build_pos_inds(dist_matrices, B, S, max_pos))

    if block_i is None:
        block_i = _pick_block_i(S, H, d_k, P, q.dtype.itemsize)
    assert S % block_i == 0
    grid = (B, S // block_i)

    grid_spec = pltpu.PrefetchScalarGridSpec(
        num_scalar_prefetch=0,
        grid=grid,
        in_specs=[
            pl.BlockSpec((1, H, block_i, d_k), lambda b, it: (b, 0, it, 0)),
            pl.BlockSpec((P, d_k), lambda b, it: (0, 0)),
            pl.BlockSpec((1, block_i, S), lambda b, it: (b, it, 0)),
        ],
        out_specs=pl.BlockSpec((1, H, block_i, S), lambda b, it: (b, 0, it, 0)),
    )

    return pl.pallas_call(
        _pos_enc_kernel,
        out_shape=jax.ShapeDtypeStruct((B, H, S, S), q.dtype),
        grid_spec=grid_spec,
        compiler_params=pltpu.CompilerParams(
            dimension_semantics=("parallel", "parallel")),
    )(q, w_rpr, pos_inds)


def positional_encoding_reference(q, w_rpr, dist_matrices):
    """Plain-JAX reference with the same math as the PyTorch forward."""
    B, H, S, _ = q.shape
    max_pos = w_rpr.shape[0] - 1
    pos_inds = jnp.asarray(_build_pos_inds(dist_matrices, B, S, max_pos))
    q_dot_rpr = jnp.einsum(
        "bhsd,pd->bhsp", q, w_rpr,
        precision=lax.Precision.HIGHEST, preferred_element_type=jnp.float32)
    idx = jnp.broadcast_to(pos_inds[:, None, :, :], (B, H, S, S))
    return jnp.take_along_axis(q_dot_rpr, idx, axis=3).astype(q.dtype)


if __name__ == "__main__":
    # Shapes consistent with the module: q [batch, heads, seq(n_edges), d_k].
    B, H, S, d_k = 2, 4, 16, 32
    max_pos = 8                           # w_rpr = nn.Linear(d_k, max_pos + 1, bias=False)
    P = max_pos + 1

    key = jax.random.PRNGKey(0)
    kq, kw, kd0, kd1 = jax.random.split(key, 4)
    q = jax.random.normal(kq, (B, H, S, d_k), dtype=jnp.float32)
    w_rpr = 0.1 * jax.random.normal(kw, (P, d_k), dtype=jnp.float32)

    # Per-mesh edge-distance matrices (host-side ints, as in the module); some entries
    # exceed max_pos to exercise the clamp.
    dist_matrices = [
        np.asarray(jax.random.randint(kd0, (S, S), 0, max_pos + 4), dtype=np.int64),
        np.asarray(jax.random.randint(kd1, (S, S), 0, max_pos + 4), dtype=np.int64),
    ]

    out = jax.block_until_ready(positional_encoding(q, w_rpr, dist_matrices))
    assert out.shape == (B, H, S, S)
    ref = positional_encoding_reference(q, w_rpr, dist_matrices)
    assert jnp.allclose(out, ref, atol=1e-3, rtol=1e-3), float(jnp.max(jnp.abs(out - ref)))

    # Ragged path: one mesh with fewer edges than max_seq (padded entries resolve to the
    # max_pos bucket, exactly as the reference module's NumPy code does).
    dist_matrices_ragged = [dist_matrices[0], dist_matrices[1][:S - 4, :S - 4]]
    out_r = jax.block_until_ready(positional_encoding(q, w_rpr, dist_matrices_ragged))
    ref_r = positional_encoding_reference(q, w_rpr, dist_matrices_ragged)
    assert jnp.allclose(out_r, ref_r, atol=1e-3, rtol=1e-3)

    print("KERNEL_OK")
</pallas_src>

<mosaic_0001>
module attributes {stable_mosaic.version = 11 : i64} {
  func.func @_pos_enc_kernel(%arg0: i32, %arg1: i32, %arg2: memref<1x4x16x32xf32, #tpu.memory_space<vmem>>, %arg3: memref<9x32xf32, #tpu.memory_space<vmem>>, %arg4: memref<1x16x16xi32, #tpu.memory_space<vmem>>, %arg5: memref<1x4x16x16xf32, #tpu.memory_space<vmem>>) attributes {dimension_semantics = [#tpu.dimension_semantics<parallel>, #tpu.dimension_semantics<parallel>], iteration_bounds = array<i64: 2, 1>, scalar_prefetch = 0 : i64, scratch_operands = 0 : i64, tpu.core_type = #tpu.core_type<tc>, window_params = [{transform_indices = @transform_0, window_bounds = array<i64: 1, 4, 16, 32>}, {pipeline_mode = #tpu.pipeline_mode<synchronous>, transform_indices = @transform_1, window_bounds = array<i64: 9, 32>}, {transform_indices = @transform_2, window_bounds = array<i64: 1, 16, 16>}, {transform_indices = @transform_3, window_bounds = array<i64: 1, 4, 16, 16>}]} {
    %c0 = arith.constant 0 : index
    %c0_0 = arith.constant 0 : index
    %0 = vector.load %arg3[%c0, %c0_0] : memref<9x32xf32, #tpu.memory_space<vmem>>, vector<9x32xf32>
    %c0_1 = arith.constant 0 : index
    %c0_2 = arith.constant 0 : index
    %c0_3 = arith.constant 0 : index
    %1 = vector.load %arg4[%c0_1, %c0_2, %c0_3] : memref<1x16x16xi32, #tpu.memory_space<vmem>>, vector<1x16x16xi32>
    %2 = vector.shape_cast %1 : vector<1x16x16xi32> to vector<16x16xi32>
    %c0_4 = arith.constant 0 : index
    %c0_5 = arith.constant 0 : index
    %c0_6 = arith.constant 0 : index
    %c0_7 = arith.constant 0 : index
    %3 = vector.load %arg2[%c0_4, %c0_5, %c0_6, %c0_7] : memref<1x4x16x32xf32, #tpu.memory_space<vmem>>, vector<1x1x16x32xf32>
    %4 = vector.shape_cast %3 : vector<1x1x16x32xf32> to vector<16x32xf32>
    %cst = arith.constant dense<0.000000e+00> : vector<16x9xf32>
    %5 = tpu.matmul %4, %0, %cst {dimension_numbers = #tpu.dot_dimension_numbers<[1], [1], [0], [0], [0, 0, 1, 0], [], []>} : vector<16x32xf32>, vector<9x32xf32>, vector<16x9xf32> -> vector<16x9xf32>
    %cst_8 = arith.constant 0.000000e+00 : f32
    %6 = vector.broadcast %cst_8 : f32 to vector<16x16xf32>
    %c0_i32 = arith.constant 0 : i32
    %7 = vector.broadcast %c0_i32 : i32 to vector<16x16xi32>
    %8 = arith.cmpi eq, %2, %7 : vector<16x16xi32>
    %9 = vector.extract_strided_slice %5 {offsets = [0, 0], sizes = [16, 1], strides = [1, 1]} : vector<16x9xf32> to vector<16x1xf32>
    %cst_9 = arith.constant 0.000000e+00 : f32
    %10 = vector.shape_cast %9 : vector<16x1xf32> to vector<16x1xf32>
    %11 = vector.broadcast %10 : vector<16x1xf32> to vector<16x16xf32>
    %12 = vector.broadcast %cst_9 : f32 to vector<16x16xf32>
    %13 = arith.select %8, %11, %12 : vector<16x16xi1>, vector<16x16xf32>
    %14 = arith.addf %6, %13 : vector<16x16xf32>
    %c1_i32 = arith.constant 1 : i32
    %15 = vector.broadcast %c1_i32 : i32 to vector<16x16xi32>
    %16 = arith.cmpi eq, %2, %15 : vector<16x16xi32>
    %17 = vector.extract_strided_slice %5 {offsets = [0, 1], sizes = [16, 1], strides = [1, 1]} : vector<16x9xf32> to vector<16x1xf32>
    %cst_10 = arith.constant 0.000000e+00 : f32
    %18 = vector.shape_cast %17 : vector<16x1xf32> to vector<16x1xf32>
    %19 = vector.broadcast %18 : vector<16x1xf32> to vector<16x16xf32>
    %20 = vector.broadcast %cst_10 : f32 to vector<16x16xf32>
    %21 = arith.select %16, %19, %20 : vector<16x16xi1>, vector<16x16xf32>
    %22 = arith.addf %14, %21 : vector<16x16xf32>
    %c2_i32 = arith.constant 2 : i32
    %23 = vector.broadcast %c2_i32 : i32 to vector<16x16xi32>
    %24 = arith.cmpi eq, %2, %23 : vector<16x16xi32>
    %25 = vector.extract_strided_slice %5 {offsets = [0, 2], sizes = [16, 1], strides = [1, 1]} : vector<16x9xf32> to vector<16x1xf32>
    %cst_11 = arith.constant 0.000000e+00 : f32
    %26 = vector.shape_cast %25 : vector<16x1xf32> to vector<16x1xf32>
    %27 = vector.broadcast %26 : vector<16x1xf32> to vector<16x16xf32>
    %28 = vector.broadcast %cst_11 : f32 to vector<16x16xf32>
    %29 = arith.select %24, %27, %28 : vector<16x16xi1>, vector<16x16xf32>
    %30 = arith.addf %22, %29 : vector<16x16xf32>
    %c3_i32 = arith.constant 3 : i32
    %31 = vector.broadcast %c3_i32 : i32 to vector<16x16xi32>
    %32 = arith.cmpi eq, %2, %31 : vector<16x16xi32>
    %33 = vector.extract_strided_slice %5 {offsets = [0, 3], sizes = [16, 1], strides = [1, 1]} : vector<16x9xf32> to vector<16x1xf32>
    %cst_12 = arith.constant 0.000000e+00 : f32
    %34 = vector.shape_cast %33 : vector<16x1xf32> to vector<16x1xf32>
    %35 = vector.broadcast %34 : vector<16x1xf32> to vector<16x16xf32>
    %36 = vector.broadcast %cst_12 : f32 to vector<16x16xf32>
    %37 = arith.select %32, %35, %36 : vector<16x16xi1>, vector<16x16xf32>
    %38 = arith.addf %30, %37 : vector<16x16xf32>
    %c4_i32 = arith.constant 4 : i32
    %39 = vector.broadcast %c4_i32 : i32 to vector<16x16xi32>
    %40 = arith.cmpi eq, %2, %39 : vector<16x16xi32>
    %41 = vector.extract_strided_slice %5 {offsets = [0, 4], sizes = [16, 1], strides = [1, 1]} : vector<16x9xf32> to vector<16x1xf32>
    %cst_13 = arith.constant 0.000000e+00 : f32
    %42 = vector.shape_cast %41 : vector<16x1xf32> to vector<16x1xf32>
    %43 = vector.broadcast %42 : vector<16x1xf32> to vector<16x16xf32>
    %44 = vector.broadcast %cst_13 : f32 to vector<16x16xf32>
    %45 = arith.select %40, %43, %44 : vector<16x16xi1>, vector<16x16xf32>
    %46 = arith.addf %38, %45 : vector<16x16xf32>
    %c5_i32 = arith.constant 5 : i32
    %47 = vector.broadcast %c5_i32 : i32 to vector<16x16xi32>
    %48 = arith.cmpi eq, %2, %47 : vector<16x16xi32>
    %49 = vector.extract_strided_slice %5 {offsets = [0, 5], sizes = [16, 1], strides = [1, 1]} : vector<16x9xf32> to vector<16x1xf32>
    %cst_14 = arith.constant 0.000000e+00 : f32
    %50 = vector.shape_cast %49 : vector<16x1xf32> to vector<16x1xf32>
    %51 = vector.broadcast %50 : vector<16x1xf32> to vector<16x16xf32>
    %52 = vector.broadcast %cst_14 : f32 to vector<16x16xf32>
    %53 = arith.select %48, %51, %52 : vector<16x16xi1>, vector<16x16xf32>
    %54 = arith.addf %46, %53 : vector<16x16xf32>
    %c6_i32 = arith.constant 6 : i32
    %55 = vector.broadcast %c6_i32 : i32 to vector<16x16xi32>
    %56 = arith.cmpi eq, %2, %55 : vector<16x16xi32>
    %57 = vector.extract_strided_slice %5 {offsets = [0, 6], sizes = [16, 1], strides = [1, 1]} : vector<16x9xf32> to vector<16x1xf32>
    %cst_15 = arith.constant 0.000000e+00 : f32
    %58 = vector.shape_cast %57 : vector<16x1xf32> to vector<16x1xf32>
    %59 = vector.broadcast %58 : vector<16x1xf32> to vector<16x16xf32>
    %60 = vector.broadcast %cst_15 : f32 to vector<16x16xf32>
    %61 = arith.select %56, %59, %60 : vector<16x16xi1>, vector<16x16xf32>
    %62 = arith.addf %54, %61 : vector<16x16xf32>
    %c7_i32 = arith.constant 7 : i32
    %63 = vector.broadcast %c7_i32 : i32 to vector<16x16xi32>
    %64 = arith.cmpi eq, %2, %63 : vector<16x16xi32>
    %65 = vector.extract_strided_slice %5 {offsets = [0, 7], sizes = [16, 1], strides = [1, 1]} : vector<16x9xf32> to vector<16x1xf32>
    %cst_16 = arith.constant 0.000000e+00 : f32
    %66 = vector.shape_cast %65 : vector<16x1xf32> to vector<16x1xf32>
    %67 = vector.broadcast %66 : vector<16x1xf32> to vector<16x16xf32>
    %68 = vector.broadcast %cst_16 : f32 to vector<16x16xf32>
    %69 = arith.select %64, %67, %68 : vector<16x16xi1>, vector<16x16xf32>
    %70 = arith.addf %62, %69 : vector<16x16xf32>
    %c8_i32 = arith.constant 8 : i32
    %71 = vector.broadcast %c8_i32 : i32 to vector<16x16xi32>
    %72 = arith.cmpi eq, %2, %71 : vector<16x16xi32>
    %73 = vector.extract_strided_slice %5 {offsets = [0, 8], sizes = [16, 1], strides = [1, 1]} : vector<16x9xf32> to vector<16x1xf32>
    %cst_17 = arith.constant 0.000000e+00 : f32
    %74 = vector.shape_cast %73 : vector<16x1xf32> to vector<16x1xf32>
    %75 = vector.broadcast %74 : vector<16x1xf32> to vector<16x16xf32>
    %76 = vector.broadcast %cst_17 : f32 to vector<16x16xf32>
    %77 = arith.select %72, %75, %76 : vector<16x16xi1>, vector<16x16xf32>
    %78 = arith.addf %70, %77 : vector<16x16xf32>
    %c0_18 = arith.constant 0 : index
    %c0_19 = arith.constant 0 : index
    %c0_20 = arith.constant 0 : index
    %c0_21 = arith.constant 0 : index
    %79 = vector.load %arg5[%c0_18, %c0_19, %c0_20, %c0_21] : memref<1x4x16x16xf32, #tpu.memory_space<vmem>>, vector<1x1x16x16xf32>
    %80 = vector.shape_cast %79 : vector<1x1x16x16xf32> to vector<16x16xf32>
    %81 = vector.shape_cast %78 : vector<16x16xf32> to vector<1x1x16x16xf32>
    tpu.vector_store %arg5[%c0_18, %c0_19, %c0_20, %c0_21], %81 {strides = array<i32>} : memref<1x4x16x16xf32, #tpu.memory_space<vmem>>, vector<1x1x16x16xf32>,
    %c0_22 = arith.constant 0 : index
    %c1 = arith.constant 1 : index
    %c0_23 = arith.constant 0 : index
    %c0_24 = arith.constant 0 : index
    %82 = vector.load %arg2[%c0_22, %c1, %c0_23, %c0_24] : memref<1x4x16x32xf32, #tpu.memory_space<vmem>>, vector<1x1x16x32xf32>
    %83 = vector.shape_cast %82 : vector<1x1x16x32xf32> to vector<16x32xf32>
    %cst_25 = arith.constant dense<0.000000e+00> : vector<16x9xf32>
    %84 = tpu.matmul %83, %0, %cst_25 {dimension_numbers = #tpu.dot_dimension_numbers<[1], [1], [0], [0], [0, 0, 1, 0], [], []>} : vector<16x32xf32>, vector<9x32xf32>, vector<16x9xf32> -> vector<16x9xf32>
    %cst_26 = arith.constant 0.000000e+00 : f32
    %85 = vector.broadcast %cst_26 : f32 to vector<16x16xf32>
    %c0_i32_27 = arith.constant 0 : i32
    %86 = vector.broadcast %c0_i32_27 : i32 to vector<16x16xi32>
    %87 = arith.cmpi eq, %2, %86 : vector<16x16xi32>
    %88 = vector.extract_strided_slice %84 {offsets = [0, 0], sizes = [16, 1], strides = [1, 1]} : vector<16x9xf32> to vector<16x1xf32>
    %cst_28 = arith.constant 0.000000e+00 : f32
    %89 = vector.shape_cast %88 : vector<16x1xf32> to vector<16x1xf32>
    %90 = vector.broadcast %89 : vector<16x1xf32> to vector<16x16xf32>
    %91 = vector.broadcast %cst_28 : f32 to vector<16x16xf32>
    %92 = arith.select %87, %90, %91 : vector<16x16xi1>, vector<16x16xf32>
    %93 = arith.addf %85, %92 : vector<16x16xf32>
    %c1_i32_29 = arith.constant 1 : i32
    %94 = vector.broadcast %c1_i32_29 : i32 to vector<16x16xi32>
    %95 = arith.cmpi eq, %2, %94 : vector<16x16xi32>
    %96 = vector.extract_strided_slice %84 {offsets = [0, 1], sizes = [16, 1], strides = [1, 1]} : vector<16x9xf32> to vector<16x1xf32>
    %cst_30 = arith.constant 0.000000e+00 : f32
    %97 = vector.shape_cast %96 : vector<16x1xf32> to vector<16x1xf32>
    %98 = vector.broadcast %97 : vector<16x1xf32> to vector<16x16xf32>
    %99 = vector.broadcast %cst_30 : f32 to vector<16x16xf32>
    %100 = arith.select %95, %98, %99 : vector<16x16xi1>, vector<16x16xf32>
    %101 = arith.addf %93, %100 : vector<16x16xf32>
    %c2_i32_31 = arith.constant 2 : i32
    %102 = vector.broadcast %c2_i32_31 : i32 to vector<16x16xi32>
    %103 = arith.cmpi eq, %2, %102 : vector<16x16xi32>
    %104 = vector.extract_strided_slice %84 {offsets = [0, 2], sizes = [16, 1], strides = [1, 1]} : vector<16x9xf32> to vector<16x1xf32>
    %cst_32 = arith.constant 0.000000e+00 : f32
    %105 = vector.shape_cast %104 : vector<16x1xf32> to vector<16x1xf32>
    %106 = vector.broadcast %105 : vector<16x1xf32> to vector<16x16xf32>
    %107 = vector.broadcast %cst_32 : f32 to vector<16x16xf32>
    %108 = arith.select %103, %106, %107 : vector<16x16xi1>, vector<16x16xf32>
    %109 = arith.addf %101, %108 : vector<16x16xf32>
    %c3_i32_33 = arith.constant 3 : i32
    %110 = vector.broadcast %c3_i32_33 : i32 to vector<16x16xi32>
    %111 = arith.cmpi eq, %2, %110 : vector<16x16xi32>
    %112 = vector.extract_strided_slice %84 {offsets = [0, 3], sizes = [16, 1], strides = [1, 1]} : vector<16x9xf32> to vector<16x1xf32>
    %cst_34 = arith.constant 0.000000e+00 : f32
    %113 = vector.shape_cast %112 : vector<16x1xf32> to vector<16x1xf32>
    %114 = vector.broadcast %113 : vector<16x1xf32> to vector<16x16xf32>
    %115 = vector.broadcast %cst_34 : f32 to vector<16x16xf32>
    %116 = arith.select %111, %114, %115 : vector<16x16xi1>, vector<16x16xf32>
    %117 = arith.addf %109, %116 : vector<16x16xf32>
    %c4_i32_35 = arith.constant 4 : i32
    %118 = vector.broadcast %c4_i32_35 : i32 to vector<16x16xi32>
    %119 = arith.cmpi eq, %2, %118 : vector<16x16xi32>
    %120 = vector.extract_strided_slice %84 {offsets = [0, 4], sizes = [16, 1], strides = [1, 1]} : vector<16x9xf32> to vector<16x1xf32>
    %cst_36 = arith.constant 0.000000e+00 : f32
    %121 = vector.shape_cast %120 : vector<16x1xf32> to vector<16x1xf32>
    %122 = vector.broadcast %121 : vector<16x1xf32> to vector<16x16xf32>
    %123 = vector.broadcast %cst_36 : f32 to vector<16x16xf32>
    %124 = arith.select %119, %122, %123 : vector<16x16xi1>, vector<16x16xf32>
    %125 = arith.addf %117, %124 : vector<16x16xf32>
    %c5_i32_37 = arith.constant 5 : i32
    %126 = vector.broadcast %c5_i32_37 : i32 to vector<16x16xi32>
    %127 = arith.cmpi eq, %2, %126 : vector<16x16xi32>
    %128 = vector.extract_strided_slice %84 {offsets = [0, 5], sizes = [16, 1], strides = [1, 1]} : vector<16x9xf32> to vector<16x1xf32>
    %cst_38 = arith.constant 0.000000e+00 : f32
    %129 = vector.shape_cast %128 : vector<16x1xf32> to vector<16x1xf32>
    %130 = vector.broadcast %129 : vector<16x1xf32> to vector<16x16xf32>
    %131 = vector.broadcast %cst_38 : f32 to vector<16x16xf32>
    %132 = arith.select %127, %130, %131 : vector<16x16xi1>, vector<16x16xf32>
    %133 = arith.addf %125, %132 : vector<16x16xf32>
    %c6_i32_39 = arith.constant 6 : i32
    %134 = vector.broadcast %c6_i32_39 : i32 to vector<16x16xi32>
    %135 = arith.cmpi eq, %2, %134 : vector<16x16xi32>
    %136 = vector.extract_strided_slice %84 {offsets = [0, 6], sizes = [16, 1], strides = [1, 1]} : vector<16x9xf32> to vector<16x1xf32>
    %cst_40 = arith.constant 0.000000e+00 : f32
    %137 = vector.shape_cast %136 : vector<16x1xf32> to vector<16x1xf32>
    %138 = vector.broadcast %137 : vector<16x1xf32> to vector<16x16xf32>
    %139 = vector.broadcast %cst_40 : f32 to vector<16x16xf32>
    %140 = arith.select %135, %138, %139 : vector<16x16xi1>, vector<16x16xf32>
    %141 = arith.addf %133, %140 : vector<16x16xf32>
    %c7_i32_41 = arith.constant 7 : i32
    %142 = vector.broadcast %c7_i32_41 : i32 to vector<16x16xi32>
    %143 = arith.cmpi eq, %2, %142 : vector<16x16xi32>
    %144 = vector.extract_strided_slice %84 {offsets = [0, 7], sizes = [16, 1], strides = [1, 1]} : vector<16x9xf32> to vector<16x1xf32>
    %cst_42 = arith.constant 0.000000e+00 : f32
    %145 = vector.shape_cast %144 : vector<16x1xf32> to vector<16x1xf32>
    %146 = vector.broadcast %145 : vector<16x1xf32> to vector<16x16xf32>
    %147 = vector.broadcast %cst_42 : f32 to vector<16x16xf32>
    %148 = arith.select %143, %146, %147 : vector<16x16xi1>, vector<16x16xf32>
    %149 = arith.addf %141, %148 : vector<16x16xf32>
    %c8_i32_43 = arith.constant 8 : i32
    %150 = vector.broadcast %c8_i32_43 : i32 to vector<16x16xi32>
    %151 = arith.cmpi eq, %2, %150 : vector<16x16xi32>
    %152 = vector.extract_strided_slice %84 {offsets = [0, 8], sizes = [16, 1], strides = [1, 1]} : vector<16x9xf32> to vector<16x1xf32>
    %cst_44 = arith.constant 0.000000e+00 : f32
    %153 = vector.shape_cast %152 : vector<16x1xf32> to vector<16x1xf32>
    %154 = vector.broadcast %153 : vector<16x1xf32> to vector<16x16xf32>
    %155 = vector.broadcast %cst_44 : f32 to vector<16x16xf32>
    %156 = arith.select %151, %154, %155 : vector<16x16xi1>, vector<16x16xf32>
    %157 = arith.addf %149, %156 : vector<16x16xf32>
    %c0_45 = arith.constant 0 : index
    %c1_46 = arith.constant 1 : index
    %c0_47 = arith.constant 0 : index
    %c0_48 = arith.constant 0 : index
    %158 = vector.load %arg5[%c0_45, %c1_46, %c0_47, %c0_48] : memref<1x4x16x16xf32, #tpu.memory_space<vmem>>, vector<1x1x16x16xf32>
    %159 = vector.shape_cast %158 : vector<1x1x16x16xf32> to vector<16x16xf32>
    %160 = vector.shape_cast %157 : vector<16x16xf32> to vector<1x1x16x16xf32>
    tpu.vector_store %arg5[%c0_45, %c1_46, %c0_47, %c0_48], %160 {strides = array<i32>} : memref<1x4x16x16xf32, #tpu.memory_space<vmem>>, vector<1x1x16x16xf32>,
    %c0_49 = arith.constant 0 : index
    %c2 = arith.constant 2 : index
    %c0_50 = arith.constant 0 : index
    %c0_51 = arith.constant 0 : index
    %161 = vector.load %arg2[%c0_49, %c2, %c0_50, %c0_51] : memref<1x4x16x32xf32, #tpu.memory_space<vmem>>, vector<1x1x16x32xf32>
    %162 = vector.shape_cast %161 : vector<1x1x16x32xf32> to vector<16x32xf32>
    %cst_52 = arith.constant dense<0.000000e+00> : vector<16x9xf32>
    %163 = tpu.matmul %162, %0, %cst_52 {dimension_numbers = #tpu.dot_dimension_numbers<[1], [1], [0], [0], [0, 0, 1, 0], [], []>} : vector<16x32xf32>, vector<9x32xf32>, vector<16x9xf32> -> vector<16x9xf32>
    %cst_53 = arith.constant 0.000000e+00 : f32
    %164 = vector.broadcast %cst_53 : f32 to vector<16x16xf32>
    %c0_i32_54 = arith.constant 0 : i32
    %165 = vector.broadcast %c0_i32_54 : i32 to vector<16x16xi32>
    %166 = arith.cmpi eq, %2, %165 : vector<16x16xi32>
    %167 = vector.extract_strided_slice %163 {offsets = [0, 0], sizes = [16, 1], strides = [1, 1]} : vector<16x9xf32> to vector<16x1xf32>
    %cst_55 = arith.constant 0.000000e+00 : f32
    %168 = vector.shape_cast %167 : vector<16x1xf32> to vector<16x1xf32>
    %169 = vector.broadcast %168 : vector<16x1xf32> to vector<16x16xf32>
    %170 = vector.broadcast %cst_55 : f32 to vector<16x16xf32>
    %171 = arith.select %166, %169, %170 : vector<16x16xi1>, vector<16x16xf32>
    %172 = arith.addf %164, %171 : vector<16x16xf32>
    %c1_i32_56 = arith.constant 1 : i32
    %173 = vector.broadcast %c1_i32_56 : i32 to vector<16x16xi32>
    %174 = arith.cmpi eq, %2, %173 : vector<16x16xi32>
    %175 = vector.extract_strided_slice %163 {offsets = [0, 1], sizes = [16, 1], strides = [1, 1]} : vector<16x9xf32> to vector<16x1xf32>
    %cst_57 = arith.constant 0.000000e+00 : f32
    %176 = vector.shape_cast %175 : vector<16x1xf32> to vector<16x1xf32>
    %177 = vector.broadcast %176 : vector<16x1xf32> to vector<16x16xf32>
    %178 = vector.broadcast %cst_57 : f32 to vector<16x16xf32>
    %179 = arith.select %174, %177, %178 : vector<16x16xi1>, vector<16x16xf32>
    %180 = arith.addf %172, %179 : vector<16x16xf32>
    %c2_i32_58 = arith.constant 2 : i32
    %181 = vector.broadcast %c2_i32_58 : i32 to vector<16x16xi32>
    %182 = arith.cmpi eq, %2, %181 : vector<16x16xi32>
    %183 = vector.extract_strided_slice %163 {offsets = [0, 2], sizes = [16, 1], strides = [1, 1]} : vector<16x9xf32> to vector<16x1xf32>
    %cst_59 = arith.constant 0.000000e+00 : f32
    %184 = vector.shape_cast %183 : vector<16x1xf32> to vector<16x1xf32>
    %185 = vector.broadcast %184 : vector<16x1xf32> to vector<16x16xf32>
    %186 = vector.broadcast %cst_59 : f32 to vector<16x16xf32>
    %187 = arith.select %182, %185, %186 : vector<16x16xi1>, vector<16x16xf32>
    %188 = arith.addf %180, %187 : vector<16x16xf32>
    %c3_i32_60 = arith.constant 3 : i32
    %189 = vector.broadcast %c3_i32_60 : i32 to vector<16x16xi32>
    %190 = arith.cmpi eq, %2, %189 : vector<16x16xi32>
    %191 = vector.extract_strided_slice %163 {offsets = [0, 3], sizes = [16, 1], strides = [1, 1]} : vector<16x9xf32> to vector<16x1xf32>
    %cst_61 = arith.constant 0.000000e+00 : f32
    %192 = vector.shape_cast %191 : vector<16x1xf32> to vector<16x1xf32>
    %193 = vector.broadcast %192 : vector<16x1xf32> to vector<16x16xf32>
    %194 = vector.broadcast %cst_61 : f32 to vector<16x16xf32>
    %195 = arith.select %190, %193, %194 : vector<16x16xi1>, vector<16x16xf32>
    %196 = arith.addf %188, %195 : vector<16x16xf32>
    %c4_i32_62 = arith.constant 4 : i32
    %197 = vector.broadcast %c4_i32_62 : i32 to vector<16x16xi32>
    %198 = arith.cmpi eq, %2, %197 : vector<16x16xi32>
    %199 = vector.extract_strided_slice %163 {offsets = [0, 4], sizes = [16, 1], strides = [1, 1]} : vector<16x9xf32> to vector<16x1xf32>
    %cst_63 = arith.constant 0.000000e+00 : f32
    %200 = vector.shape_cast %199 : vector<16x1xf32> to vector<16x1xf32>
    %201 = vector.broadcast %200 : vector<16x1xf32> to vector<16x16xf32>
    %202 = vector.broadcast %cst_63 : f32 to vector<16x16xf32>
    %203 = arith.select %198, %201, %202 : vector<16x16xi1>, vector<16x16xf32>
    %204 = arith.addf %196, %203 : vector<16x16xf32>
    %c5_i32_64 = arith.constant 5 : i32
    %205 = vector.broadcast %c5_i32_64 : i32 to vector<16x16xi32>
    %206 = arith.cmpi eq, %2, %205 : vector<16x16xi32>
    %207 = vector.extract_strided_slice %163 {offsets = [0, 5], sizes = [16, 1], strides = [1, 1]} : vector<16x9xf32> to vector<16x1xf32>
    %cst_65 = arith.constant 0.000000e+00 : f32
    %208 = vector.shape_cast %207 : vector<16x1xf32> to vector<16x1xf32>
    %209 = vector.broadcast %208 : vector<16x1xf32> to vector<16x16xf32>
    %210 = vector.broadcast %cst_65 : f32 to vector<16x16xf32>
    %211 = arith.select %206, %209, %210 : vector<16x16xi1>, vector<16x16xf32>
    %212 = arith.addf %204, %211 : vector<16x16xf32>
    %c6_i32_66 = arith.constant 6 : i32
    %213 = vector.broadcast %c6_i32_66 : i32 to vector<16x16xi32>
    %214 = arith.cmpi eq, %2, %213 : vector<16x16xi32>
    %215 = vector.extract_strided_slice %163 {offsets = [0, 6], sizes = [16, 1], strides = [1, 1]} : vector<16x9xf32> to vector<16x1xf32>
    %cst_67 = arith.constant 0.000000e+00 : f32
    %216 = vector.shape_cast %215 : vector<16x1xf32> to vector<16x1xf32>
    %217 = vector.broadcast %216 : vector<16x1xf32> to vector<16x16xf32>
    %218 = vector.broadcast %cst_67 : f32 to vector<16x16xf32>
    %219 = arith.select %214, %217, %218 : vector<16x16xi1>, vector<16x16xf32>
    %220 = arith.addf %212, %219 : vector<16x16xf32>
    %c7_i32_68 = arith.constant 7 : i32
    %221 = vector.broadcast %c7_i32_68 : i32 to vector<16x16xi32>
    %222 = arith.cmpi eq, %2, %221 : vector<16x16xi32>
    %223 = vector.extract_strided_slice %163 {offsets = [0, 7], sizes = [16, 1], strides = [1, 1]} : vector<16x9xf32> to vector<16x1xf32>
    %cst_69 = arith.constant 0.000000e+00 : f32
    %224 = vector.shape_cast %223 : vector<16x1xf32> to vector<16x1xf32>
    %225 = vector.broadcast %224 : vector<16x1xf32> to vector<16x16xf32>
    %226 = vector.broadcast %cst_69 : f32 to vector<16x16xf32>
    %227 = arith.select %222, %225, %226 : vector<16x16xi1>, vector<16x16xf32>
    %228 = arith.addf %220, %227 : vector<16x16xf32>
    %c8_i32_70 = arith.constant 8 : i32
    %229 = vector.broadcast %c8_i32_70 : i32 to vector<16x16xi32>
    %230 = arith.cmpi eq, %2, %229 : vector<16x16xi32>
    %231 = vector.extract_strided_slice %163 {offsets = [0, 8], sizes = [16, 1], strides = [1, 1]} : vector<16x9xf32> to vector<16x1xf32>
    %cst_71 = arith.constant 0.000000e+00 : f32
    %232 = vector.shape_cast %231 : vector<16x1xf32> to vector<16x1xf32>
    %233 = vector.broadcast %232 : vector<16x1xf32> to vector<16x16xf32>
    %234 = vector.broadcast %cst_71 : f32 to vector<16x16xf32>
    %235 = arith.select %230, %233, %234 : vector<16x16xi1>, vector<16x16xf32>
    %236 = arith.addf %228, %235 : vector<16x16xf32>
    %c0_72 = arith.constant 0 : index
    %c2_73 = arith.constant 2 : index
    %c0_74 = arith.constant 0 : index
    %c0_75 = arith.constant 0 : index
    %237 = vector.load %arg5[%c0_72, %c2_73, %c0_74, %c0_75] : memref<1x4x16x16xf32, #tpu.memory_space<vmem>>, vector<1x1x16x16xf32>
    %238 = vector.shape_cast %237 : vector<1x1x16x16xf32> to vector<16x16xf32>
    %239 = vector.shape_cast %236 : vector<16x16xf32> to vector<1x1x16x16xf32>
    tpu.vector_store %arg5[%c0_72, %c2_73, %c0_74, %c0_75], %239 {strides = array<i32>} : memref<1x4x16x16xf32, #tpu.memory_space<vmem>>, vector<1x1x16x16xf32>,
    %c0_76 = arith.constant 0 : index
    %c3 = arith.constant 3 : index
    %c0_77 = arith.constant 0 : index
    %c0_78 = arith.constant 0 : index
    %240 = vector.load %arg2[%c0_76, %c3, %c0_77, %c0_78] : memref<1x4x16x32xf32, #tpu.memory_space<vmem>>, vector<1x1x16x32xf32>
    %241 = vector.shape_cast %240 : vector<1x1x16x32xf32> to vector<16x32xf32>
    %cst_79 = arith.constant dense<0.000000e+00> : vector<16x9xf32>
    %242 = tpu.matmul %241, %0, %cst_79 {dimension_numbers = #tpu.dot_dimension_numbers<[1], [1], [0], [0], [0, 0, 1, 0], [], []>} : vector<16x32xf32>, vector<9x32xf32>, vector<16x9xf32> -> vector<16x9xf32>
    %cst_80 = arith.constant 0.000000e+00 : f32
    %243 = vector.broadcast %cst_80 : f32 to vector<16x16xf32>
    %c0_i32_81 = arith.constant 0 : i32
    %244 = vector.broadcast %c0_i32_81 : i32 to vector<16x16xi32>
    %245 = arith.cmpi eq, %2, %244 : vector<16x16xi32>
    %246 = vector.extract_strided_slice %242 {offsets = [0, 0], sizes = [16, 1], strides = [1, 1]} : vector<16x9xf32> to vector<16x1xf32>
    %cst_82 = arith.constant 0.000000e+00 : f32
    %247 = vector.shape_cast %246 : vector<16x1xf32> to vector<16x1xf32>
    %248 = vector.broadcast %247 : vector<16x1xf32> to vector<16x16xf32>
    %249 = vector.broadcast %cst_82 : f32 to vector<16x16xf32>
    %250 = arith.select %245, %248, %249 : vector<16x16xi1>, vector<16x16xf32>
    %251 = arith.addf %243, %250 : vector<16x16xf32>
    %c1_i32_83 = arith.constant 1 : i32
    %252 = vector.broadcast %c1_i32_83 : i32 to vector<16x16xi32>
    %253 = arith.cmpi eq, %2, %252 : vector<16x16xi32>
    %254 = vector.extract_strided_slice %242 {offsets = [0, 1], sizes = [16, 1], strides = [1, 1]} : vector<16x9xf32> to vector<16x1xf32>
    %cst_84 = arith.constant 0.000000e+00 : f32
    %255 = vector.shape_cast %254 : vector<16x1xf32> to vector<16x1xf32>
    %256 = vector.broadcast %255 : vector<16x1xf32> to vector<16x16xf32>
    %257 = vector.broadcast %cst_84 : f32 to vector<16x16xf32>
    %258 = arith.select %253, %256, %257 : vector<16x16xi1>, vector<16x16xf32>
    %259 = arith.addf %251, %258 : vector<16x16xf32>
    %c2_i32_85 = arith.constant 2 : i32
    %260 = vector.broadcast %c2_i32_85 : i32 to vector<16x16xi32>
    %261 = arith.cmpi eq, %2, %260 : vector<16x16xi32>
    %262 = vector.extract_strided_slice %242 {offsets = [0, 2], sizes = [16, 1], strides = [1, 1]} : vector<16x9xf32> to vector<16x1xf32>
    %cst_86 = arith.constant 0.000000e+00 : f32
    %263 = vector.shape_cast %262 : vector<16x1xf32> to vector<16x1xf32>
    %264 = vector.broadcast %263 : vector<16x1xf32> to vector<16x16xf32>
    %265 = vector.broadcast %cst_86 : f32 to vector<16x16xf32>
    %266 = arith.select %261, %264, %265 : vector<16x16xi1>, vector<16x16xf32>
    %267 = arith.addf %259, %266 : vector<16x16xf32>
    %c3_i32_87 = arith.constant 3 : i32
    %268 = vector.broadcast %c3_i32_87 : i32 to vector<16x16xi32>
    %269 = arith.cmpi eq, %2, %268 : vector<16x16xi32>
    %270 = vector.extract_strided_slice %242 {offsets = [0, 3], sizes = [16, 1], strides = [1, 1]} : vector<16x9xf32> to vector<16x1xf32>
    %cst_88 = arith.constant 0.000000e+00 : f32
    %271 = vector.shape_cast %270 : vector<16x1xf32> to vector<16x1xf32>
    %272 = vector.broadcast %271 : vector<16x1xf32> to vector<16x16xf32>
    %273 = vector.broadcast %cst_88 : f32 to vector<16x16xf32>
    %274 = arith.select %269, %272, %273 : vector<16x16xi1>, vector<16x16xf32>
    %275 = arith.addf %267, %274 : vector<16x16xf32>
    %c4_i32_89 = arith.constant 4 : i32
    %276 = vector.broadcast %c4_i32_89 : i32 to vector<16x16xi32>
    %277 = arith.cmpi eq, %2, %276 : vector<16x16xi32>
    %278 = vector.extract_strided_slice %242 {offsets = [0, 4], sizes = [16, 1], strides = [1, 1]} : vector<16x9xf32> to vector<16x1xf32>
    %cst_90 = arith.constant 0.000000e+00 : f32
    %279 = vector.shape_cast %278 : vector<16x1xf32> to vector<16x1xf32>
    %280 = vector.broadcast %279 : vector<16x1xf32> to vector<16x16xf32>
    %281 = vector.broadcast %cst_90 : f32 to vector<16x16xf32>
    %282 = arith.select %277, %280, %281 : vector<16x16xi1>, vector<16x16xf32>
    %283 = arith.addf %275, %282 : vector<16x16xf32>
    %c5_i32_91 = arith.constant 5 : i32
    %284 = vector.broadcast %c5_i32_91 : i32 to vector<16x16xi32>
    %285 = arith.cmpi eq, %2, %284 : vector<16x16xi32>
    %286 = vector.extract_strided_slice %242 {offsets = [0, 5], sizes = [16, 1], strides = [1, 1]} : vector<16x9xf32> to vector<16x1xf32>
    %cst_92 = arith.constant 0.000000e+00 : f32
    %287 = vector.shape_cast %286 : vector<16x1xf32> to vector<16x1xf32>
    %288 = vector.broadcast %287 : vector<16x1xf32> to vector<16x16xf32>
    %289 = vector.broadcast %cst_92 : f32 to vector<16x16xf32>
    %290 = arith.select %285, %288, %289 : vector<16x16xi1>, vector<16x16xf32>
    %291 = arith.addf %283, %290 : vector<16x16xf32>
    %c6_i32_93 = arith.constant 6 : i32
    %292 = vector.broadcast %c6_i32_93 : i32 to vector<16x16xi32>
    %293 = arith.cmpi eq, %2, %292 : vector<16x16xi32>
    %294 = vector.extract_strided_slice %242 {offsets = [0, 6], sizes = [16, 1], strides = [1, 1]} : vector<16x9xf32> to vector<16x1xf32>
    %cst_94 = arith.constant 0.000000e+00 : f32
    %295 = vector.shape_cast %294 : vector<16x1xf32> to vector<16x1xf32>
    %296 = vector.broadcast %295 : vector<16x1xf32> to vector<16x16xf32>
    %297 = vector.broadcast %cst_94 : f32 to vector<16x16xf32>
    %298 = arith.select %293, %296, %297 : vector<16x16xi1>, vector<16x16xf32>
    %299 = arith.addf %291, %298 : vector<16x16xf32>
    %c7_i32_95 = arith.constant 7 : i32
    %300 = vector.broadcast %c7_i32_95 : i32 to vector<16x16xi32>
    %301 = arith.cmpi eq, %2, %300 : vector<16x16xi32>
    %302 = vector.extract_strided_slice %242 {offsets = [0, 7], sizes = [16, 1], strides = [1, 1]} : vector<16x9xf32> to vector<16x1xf32>
    %cst_96 = arith.constant 0.000000e+00 : f32
    %303 = vector.shape_cast %302 : vector<16x1xf32> to vector<16x1xf32>
    %304 = vector.broadcast %303 : vector<16x1xf32> to vector<16x16xf32>
    %305 = vector.broadcast %cst_96 : f32 to vector<16x16xf32>
    %306 = arith.select %301, %304, %305 : vector<16x16xi1>, vector<16x16xf32>
    %307 = arith.addf %299, %306 : vector<16x16xf32>
    %c8_i32_97 = arith.constant 8 : i32
    %308 = vector.broadcast %c8_i32_97 : i32 to vector<16x16xi32>
    %309 = arith.cmpi eq, %2, %308 : vector<16x16xi32>
    %310 = vector.extract_strided_slice %242 {offsets = [0, 8], sizes = [16, 1], strides = [1, 1]} : vector<16x9xf32> to vector<16x1xf32>
    %cst_98 = arith.constant 0.000000e+00 : f32
    %311 = vector.shape_cast %310 : vector<16x1xf32> to vector<16x1xf32>
    %312 = vector.broadcast %311 : vector<16x1xf32> to vector<16x16xf32>
    %313 = vector.broadcast %cst_98 : f32 to vector<16x16xf32>
    %314 = arith.select %309, %312, %313 : vector<16x16xi1>, vector<16x16xf32>
    %315 = arith.addf %307, %314 : vector<16x16xf32>
    %c0_99 = arith.constant 0 : index
    %c3_100 = arith.constant 3 : index
    %c0_101 = arith.constant 0 : index
    %c0_102 = arith.constant 0 : index
    %316 = vector.load %arg5[%c0_99, %c3_100, %c0_101, %c0_102] : memref<1x4x16x16xf32, #tpu.memory_space<vmem>>, vector<1x1x16x16xf32>
    %317 = vector.shape_cast %316 : vector<1x1x16x16xf32> to vector<16x16xf32>
    %318 = vector.shape_cast %315 : vector<16x16xf32> to vector<1x1x16x16xf32>
    tpu.vector_store %arg5[%c0_99, %c3_100, %c0_101, %c0_102], %318 {strides = array<i32>} : memref<1x4x16x16xf32, #tpu.memory_space<vmem>>, vector<1x1x16x16xf32>,
    return
  }
  func.func @transform_0(%arg0: i32, %arg1: i32) -> (i32, i32, i32, i32) {
    %c0_i32 = arith.constant 0 : i32
    %c0_i32_0 = arith.constant 0 : i32
    %c0_i32_1 = arith.constant 0 : i32
    return %arg0, %c0_i32, %arg1, %c0_i32_0 : i32, i32, i32, i32
  }
  func.func @transform_1(%arg0: i32, %arg1: i32) -> (i32, i32) {
    %c0_i32 = arith.constant 0 : i32
    %c0_i32_0 = arith.constant 0 : i32
    %c0_i32_1 = arith.constant 0 : i32
    return %c0_i32, %c0_i32_0 : i32, i32
  }
  func.func @transform_2(%arg0: i32, %arg1: i32) -> (i32, i32, i32) {
    %c0_i32 = arith.constant 0 : i32
    %c0_i32_0 = arith.constant 0 : i32
    return %arg0, %arg1, %c0_i32 : i32, i32, i32
  }
  func.func @transform_3(%arg0: i32, %arg1: i32) -> (i32, i32, i32, i32) {
    %c0_i32 = arith.constant 0 : i32
    %c0_i32_0 = arith.constant 0 : i32
    %c0_i32_1 = arith.constant 0 : i32
    return %arg0, %c0_i32, %arg1, %c0_i32_0 : i32, i32, i32, i32
  }
}

</mosaic_0001>

<llo_original>
// kernel: tpu_custom_call.1
$region0: #{tpu_custom_call.1}
  #allocation0 [shape = 'u32[]', space=smem, size = 0x4, offset = 0x4, fixed_abs, tag = 'smem constant byte address 0x4 - core index']
  #allocation1 [shape = 'u32[144,128]{1,0:T(1,128)}', space=vmem, size = 0x12000, scoped, tag = 'internal scratch']
  %s0 = inlined_call_operand.hbm [shape: f32[2,4,16,32], index: 0, kind: input, shape index: {}]
  %s1 = inlined_call_operand.hbm [shape: f32[9,32], index: 1, kind: input, shape index: {}]
  %s2 = inlined_call_operand.hbm [shape: s32[2,16,16], index: 2, kind: input, shape index: {}]
  %s3 = inlined_call_operand.hbm [shape: f32[2,4,16,16], index: 3, kind: output, shape index: {}]
  %s4 = sld [smem:[#allocation0]]
  $region57: #{tpu_custom_call.1} parent=0
    _
  %s6 = ssub.s32 1, %s4
  %s7 = scalar_select 0, %s6, %s4
  $region1: #{tpu_custom_call.1} parent=0
    #allocation2 [shape = 'u8[65536]{0}', space=vmem, size = 0x10000, scoped, tag = 'input window, operand 0']
    #allocation3 [shape = 's32[2]{0}', space=sflag, size = 0x8, scoped, tag = 'scoped memory for tpu_custom_call.1']
    #allocation4 [shape = 's32[2]{0}', space=sflag, size = 0x8, scoped, tag = 'scoped memory for tpu_custom_call.1']
    #allocation5 [shape = 'u8[8192]{0}', space=vmem, size = 0x2000, scoped, tag = 'input window, operand 1, single buffered']
    #allocation6 [shape = 's32[1]{0}', space=sflag, size = 0x4, scoped, tag = 'scoped memory for tpu_custom_call.1']
    #allocation7 [shape = 'u8[16384]{0}', space=vmem, size = 0x4000, scoped, tag = 'input window, operand 2']
    #allocation8 [shape = 'u8[65536]{0}', space=vmem, size = 0x10000, scoped, tag = 'output window, operand 0']
    %8 = vsyncpa [#allocation3], 0
    %s9 = scalar_lea.sflag [#allocation3], 1
    %10 = vsyncpa %s9, 0
    %11 = vsyncpa [#allocation6], 0
    %12 = vsyncpa [#allocation4], 0
    %s13 = scalar_lea.sflag [#allocation4], 1
    %14 = vsyncpa %s13, 0
    loop: start=0, step=1, limit=4
    $region2: #{tpu_custom_call.1} parent=1 // loop_pre_header
      _
    $region3: #{tpu_custom_call.1} parent=1 // loop_header
      %s16 = sphi 0, %s20
      %p17 = scmp.ge.s32.totalorder %s16, 4
      %s23 = sphi 0, %s35
      %s24 = sphi 0, %s31
      %s25 = sphi 0, %s23
      %s26 = sphi 0, %s24
      %s27 = sphi 0, %s25
      %s28 = sphi 0, %s26
      %s40 = sphi 0, %s42
      %s43 = sphi 0, %s40
      %s44 = sphi 0, %s43
      %s60 = sphi 0, %s44
      %s64 = sphi 0, %s64
      %s66 = sphi 0, %s64
      %s67 = sphi 0, %s66
      %s81 = sphi 0, %s67
      %s89 = sphi 0, %s91
      %s92 = sphi 0, %s89
      %s93 = sphi 0, %s92
      %s109 = sphi 0, %s93
      %s117 = sphi 0, %s119
      %s120 = sphi 0, %s117
      %s121 = sphi 0, %s120
      %s137 = sphi 0, %s121
    $region4: #{tpu_custom_call.1} parent=1 // loop_header_branch
      %19 = sbr.rel (%p17) target = $region8
    $region5: #{tpu_custom_call.1} parent=1 // loop_body
      %s21 = ssub.s32 %s16, 1
      %s22 = ssub.s32 %s16, 2
      %s29 = sadd.s32 1, %s24
      %p30 = scmp.ge.s32.totalorder %s29, 1
      %s31 = scalar_select %p30, 0, %s29
      %s32 = sadd.s32 1, %s23
      %s33 = scalar_select %p30, %s32, %s23
      %p34 = scmp.ge.s32.totalorder %s33, 2
      %s35 = scalar_select %p34, 0, %s33
      %s36 = ssub.s32 %s23, %s35
      %s37 = ssub.s32 %s24, %s31
      %s38 = sor.u32 %s36, %s37
      %p39 = scmp.eq.s32.totalorder %s38, 0
      %s41 = sadd.s32 %s40, 1
      %s42 = scalar_select %p39, %s40, %s41
      %p45 = pneg %p39
      %p46 = scmp.eq.s32.totalorder %s16, 1
      %p47 = por %p45, %p46
      %p48 = scmp.ne.s32.totalorder %s40, %s43
      %p49 = scmp.eq.s32.totalorder %s16, 0
      %p50 = por %p48, %p49
      %p51 = scmp.ne.s32.totalorder %s40, %s43
      %p52 = scmp.eq.s32.totalorder %s21, 1
      %p53 = por %p51, %p52
      %p54 = scmp.ne.s32.totalorder %s43, %s44
      %p55 = scmp.eq.s32.totalorder %s21, 0
      %p56 = por %p54, %p55
      %p57 = scmp.ne.s32.totalorder %s43, %s44
      %p58 = scmp.eq.s32.totalorder %s22, 1
      %p59 = por %p57, %p58
      %p61 = scmp.ne.s32.totalorder %s44, %s60
      %p62 = scmp.eq.s32.totalorder %s22, 0
      %p63 = por %p61, %p62
      %s65 = sadd.s32 %s64, 1
      %p68 = scmp.eq.s32.totalorder %s16, 1
      %p69 = scmp.ne.s32.totalorder %s64, %s66
      %p70 = scmp.eq.s32.totalorder %s16, 0
      %p71 = por %p69, %p70
      %p72 = scmp.ne.s32.totalorder %s64, %s66
      %p73 = scmp.eq.s32.totalorder %s21, 1
      %p74 = por %p72, %p73
      %p75 = scmp.ne.s32.totalorder %s66, %s67
      %p76 = scmp.eq.s32.totalorder %s21, 0
      %p77 = por %p75, %p76
      %p78 = scmp.ne.s32.totalorder %s66, %s67
      %p79 = scmp.eq.s32.totalorder %s22, 1
      %p80 = por %p78, %p79
      %p82 = scmp.ne.s32.totalorder %s67, %s81
      %p83 = scmp.eq.s32.totalorder %s22, 0
      %p84 = por %p82, %p83
      %s85 = ssub.s32 %s23, %s35
      %s86 = ssub.s32 %s24, %s31
      %s87 = sor.u32 %s85, %s86
      %p88 = scmp.eq.s32.totalorder %s87, 0
      %s90 = sadd.s32 %s89, 1
      %s91 = scalar_select %p88, %s89, %s90
      %p94 = pneg %p88
      %p95 = scmp.eq.s32.totalorder %s16, 1
      %p96 = por %p94, %p95
      %p97 = scmp.ne.s32.totalorder %s89, %s92
      %p98 = scmp.eq.s32.totalorder %s16, 0
      %p99 = por %p97, %p98
      %p100 = scmp.ne.s32.totalorder %s89, %s92
      %p101 = scmp.eq.s32.totalorder %s21, 1
      %p102 = por %p100, %p101
      %p103 = scmp.ne.s32.totalorder %s92, %s93
      %p104 = scmp.eq.s32.totalorder %s21, 0
      %p105 = por %p103, %p104
      %p106 = scmp.ne.s32.totalorder %s92, %s93
      %p107 = scmp.eq.s32.totalorder %s22, 1
      %p108 = por %p106, %p107
      %p110 = scmp.ne.s32.totalorder %s93, %s109
      %p111 = scmp.eq.s32.totalorder %s22, 0
      %p112 = por %p110, %p111
      %s113 = ssub.s32 %s23, %s35
      %s114 = ssub.s32 %s24, %s31
      %s115 = sor.u32 %s113, %s114
      %p116 = scmp.eq.s32.totalorder %s115, 0
      %s118 = sadd.s32 %s117, 1
      %s119 = scalar_select %p116, %s117, %s118
      %p122 = pneg %p116
      %p123 = scmp.eq.s32.totalorder %s16, 1
      %p124 = por %p122, %p123
      %p125 = scmp.ne.s32.totalorder %s117, %s120
      %p126 = scmp.eq.s32.totalorder %s16, 0
      %p127 = por %p125, %p126
      %p128 = scmp.ne.s32.totalorder %s117, %s120
      %p129 = scmp.eq.s32.totalorder %s21, 1
      %p130 = por %p128, %p129
      %p131 = scmp.ne.s32.totalorder %s120, %s121
      %p132 = scmp.eq.s32.totalorder %s21, 0
      %p133 = por %p131, %p132
      %p134 = scmp.ne.s32.totalorder %s120, %s121
      %p135 = scmp.eq.s32.totalorder %s22, 1
      %p136 = por %p134, %p135
      %p138 = scmp.ne.s32.totalorder %s121, %s137
      %p139 = scmp.eq.s32.totalorder %s22, 0
      %p140 = por %p138, %p139
      %p141 = scmp.le.s32.totalorder 1, %s16
      %p142 = scmp.lt.s32.totalorder %s16, 3
      %p143 = pnand %p141, %p142
      %p144 = pneg %p143
      // Predicated region
      $region9: #{tpu_custom_call.1} parent=5 // pred_check
        _
      $region10: #{tpu_custom_call.1} parent=5 // pred_check_branch
        %146 = sbr.rel (%p143) target = $region12
      $region11: #{tpu_custom_call.1} parent=5 // pred_region
        %s147 = ssub.s32 %s16, 1
        // Predicated region
        $region13: #{tpu_custom_call.1} parent=11 // pred_check
          %p148 = pneg %p77
        $region14: #{tpu_custom_call.1} parent=11 // pred_check_branch
          %150 = sbr.rel (%p148) target = $region16
        $region15: #{tpu_custom_call.1} parent=11 // pred_region
          %s152 = ssub.s32 256, 256
          %153 = vsyncadd [#allocation6], %s152
          %s154 = sshll.u32 [#allocation5], 4
          %s155 = int_to_ptr.vmem [resolvable:$true] %s154
          %160 = dma.hbm_to_vmem [thread:$0]  %s1, 256, %s155, [#allocation6], 128, 128, 8
        $region16: #{tpu_custom_call.1} parent=11 // pred_fallthru
          _
      $region12: #{tpu_custom_call.1} parent=5 // pred_fallthru
        _
      %p161 = scmp.lt.s32.totalorder %s16, 2
      // Predicated region
      $region17: #{tpu_custom_call.1} parent=5 // pred_check
        %p162 = pneg %p161
      $region18: #{tpu_custom_call.1} parent=5 // pred_check_branch
        %164 = sbr.rel (%p162) target = $region20
      $region19: #{tpu_custom_call.1} parent=5 // pred_region
        // Predicated region
        $region21: #{tpu_custom_call.1} parent=19 // pred_check
          %p165 = pneg %p50
        $region22: #{tpu_custom_call.1} parent=19 // pred_check_branch
          %167 = sbr.rel (%p165) target = $region24
        $region23: #{tpu_custom_call.1} parent=19 // pred_region
          %s168 = sand.u32 %s16, 1
          %s169 = scalar_lea.sflag [#allocation3], %s168
          %s170 = sand.u32 %s40, 1
          %s171 = smul.addr %s170, 64
          %s172 = scalar_lea.vmem [#allocation2], %s171
          %s173 = smul.u32 2, %s24
          %s175 = ssub.s32 1024, 1024
          %176 = vsyncadd %s169, %s175
          %s177 = smul.addr %s23, 8
          %s178 = sadd.s32 %s173, %s177
          %s179 = smul.addr %s178, 128
          %s180 = scalar_lea.hbm %s0, %s179
          %s181 = sshll.u32 %s172, 4
          %s182 = int_to_ptr.vmem [resolvable:$true] %s181
          %187 = dma.hbm_to_vmem [thread:$0]  %s180, 1024, %s182, %s169, 128, 128, 8
        $region24: #{tpu_custom_call.1} parent=19 // pred_fallthru
          _
        // Predicated region
        $region25: #{tpu_custom_call.1} parent=19 // pred_check
          %p188 = pneg %p99
        $region26: #{tpu_custom_call.1} parent=19 // pred_check_branch
          %190 = sbr.rel (%p188) target = $region28
        $region27: #{tpu_custom_call.1} parent=19 // pred_region
          %s191 = sand.u32 %s16, 1
          %s192 = scalar_lea.sflag [#allocation3], %s191
          %s193 = sand.u32 %s89, 1
          %s194 = smul.addr %s193, 16
          %s195 = scalar_lea.vmem [#allocation7], %s194
          %s196 = smul.u32 2, %s24
          %s198 = ssub.s32 256, 256
          %199 = vsyncadd %s192, %s198
          %s200 = smul.addr %s23, 2
          %s201 = sadd.s32 %s196, %s200
          %s202 = smul.addr %s201, 128
          %s203 = scalar_lea.hbm %s2, %s202
          %s204 = sshll.u32 %s195, 4
          %s205 = int_to_ptr.vmem [resolvable:$true] %s204
          %210 = dma.hbm_to_vmem [thread:$0]  %s203, 256, %s205, %s192, 128, 128, 8
        $region28: #{tpu_custom_call.1} parent=19 // pred_fallthru
          _
      $region20: #{tpu_custom_call.1} parent=5 // pred_fallthru
        _
      %p211 = scmp.le.s32.totalorder 1, %s16
      %p212 = scmp.lt.s32.totalorder %s16, 3
      %p213 = pnand %p211, %p212
      %p214 = pneg %p213
      // Predicated region
      $region29: #{tpu_custom_call.1} parent=5 // pred_check
        _
      $region30: #{tpu_custom_call.1} parent=5 // pred_check_branch
        %216 = sbr.rel (%p213) target = $region32
      $region31: #{tpu_custom_call.1} parent=5 // pred_region
        %s217 = ssub.s32 %s16, 1
        %s218 = sand.u32 %s21, 1
        %s219 = scalar_lea.sflag [#allocation3], %s218
        %s220 = sand.u32 %s43, 1
        %s221 = smul.addr %s220, 64
        %s222 = scalar_lea.vmem [#allocation2], %s221
        // Predicated region
        $region33: #{tpu_custom_call.1} parent=31 // pred_check
          %p223 = pneg %p56
        $region34: #{tpu_custom_call.1} parent=31 // pred_check_branch
          %225 = sbr.rel (%p223) target = $region36
        $region35: #{tpu_custom_call.1} parent=31 // pred_region
          %226 = dma.done %s219, 1024
        $region36: #{tpu_custom_call.1} parent=31 // pred_fallthru
          _
        // Predicated region
        $region37: #{tpu_custom_call.1} parent=31 // pred_check
          %p227 = pneg %p77
        $region38: #{tpu_custom_call.1} parent=31 // pred_check_branch
          %229 = sbr.rel (%p227) target = $region40
        $region39: #{tpu_custom_call.1} parent=31 // pred_region
          %230 = dma.done [#allocation6], 256
        $region40: #{tpu_custom_call.1} parent=31 // pred_fallthru
          _
        %s231 = sand.u32 %s21, 1
        %s232 = scalar_lea.sflag [#allocation3], %s231
        %s233 = sand.u32 %s92, 1
        %s234 = smul.addr %s233, 16
        %s235 = scalar_lea.vmem [#allocation7], %s234
        // Predicated region
        $region41: #{tpu_custom_call.1} parent=31 // pred_check
          %p236 = pneg %p105
        $region42: #{tpu_custom_call.1} parent=31 // pred_check_branch
          %238 = sbr.rel (%p236) target = $region44
        $region43: #{tpu_custom_call.1} parent=31 // pred_region
          %239 = dma.done %s232, 256
        $region44: #{tpu_custom_call.1} parent=31 // pred_fallthru
          _
        %s240 = sand.u32 %s21, 1
        %s241 = scalar_lea.sflag [#allocation3], %s240
        %s242 = sand.u32 %s43, 1
        %s243 = smul.addr %s242, 64
        %s244 = scalar_lea.vmem [#allocation2], %s243
        %p245 = pneg %p56
        %p246 = pneg %p53
        %p247 = pneg %p77
        %p248 = pneg %p74
        %s249 = sand.u32 %s21, 1
        %s250 = scalar_lea.sflag [#allocation3], %s249
        %s251 = sand.u32 %s92, 1
        %s252 = smul.addr %s251, 16
        %s253 = scalar_lea.vmem [#allocation7], %s252
        %p254 = pneg %p105
        %p255 = pneg %p102
        %p256 = pneg %p133
        %p257 = pneg %p130
        %s258 = sand.u32 %s120, 1
        %s259 = scalar_lea.sflag [#allocation4], %s258
        %s260 = sand.u32 %s120, 1
        %s261 = smul.addr %s260, 64
        %s262 = scalar_lea.vmem [#allocation8], %s261
        %s263 = smul.u32 2, %s26
        %s264 = smul.u32 2, %s26
        %s265 = smul.u32 2, %s26
        %v266 = vld [vmem:[#allocation5] sm:$0xff]
        %v267 = vld [vmem:[#allocation5 + $0x8] sm:$0x1]
        %v268 = vld [vmem:[%s235] sm:$0xff]
        %v269 = vld [vmem:[%s235 + $0x8] sm:$0xff]
        %v270 = vld [vmem:[%s222] sm:$0xff]
        %v271 = vld [vmem:[%s222 + $0x8] sm:$0xff]
        %vm272 = vcmask 261120
        %v274 = vsel %vm272, %v270, 0
        %v277 = vsel %vm272, %v271, 0
        %v280 = vsel %vm272, %v266, 0
        %v283 = vsel %vm272, %v267, 0
        %285 = vmatprep.subr.mxu0 0.0
        %286 = vmatpush1.xpose.msra.mxu0 %v280
        %287 = vmatprep.subr.mxu0 0.0
        %288 = vmatpush1.xpose.msra.mxu0 %v283
        %289 = vmatprep.subr.mxu0 0.0
        %290 = vmatpush1.xpose.msra.mxu0 0.0
        %291 = vmatprep.subr.mxu0 0.0
        %292 = vmatpush1.xpose.msra.mxu0 0.0
        %293 = vmatprep.subr.mxu0 0.0
        %294 = vmatpush1.xpose.msra.mxu0 0.0
        %295 = vmatprep.subr.mxu0 0.0
        %296 = vmatpush1.xpose.msra.mxu0 0.0
        %297 = vmatprep.subr.mxu0 0.0
        %298 = vmatpush1.xpose.msra.mxu0 0.0
        %299 = vmatprep.subr.mxu0 0.0
        %300 = vmatpush1.xpose.msra.mxu0 0.0
        %301 = vmatprep.subr.mxu0 0.0
        %302 = vmatpush1.xpose.msra.mxu0 0.0
        %303 = vmatprep.subr.mxu0 0.0
        %304 = vmatpush1.xpose.msra.mxu0 0.0
        %305 = vmatprep.subr.mxu0 0.0
        %306 = vmatpush1.xpose.msra.mxu0 0.0
        %307 = vmatprep.subr.mxu0 0.0
        %308 = vmatpush1.xpose.msra.mxu0 0.0
        %309 = vmatprep.subr.mxu0 0.0
        %310 = vmatpush1.xpose.msra.mxu0 0.0
        %311 = vmatprep.subr.mxu0 0.0
        %312 = vmatpush1.xpose.msra.mxu0 0.0
        %313 = vmatprep.subr.mxu0 0.0
        %314 = vmatpush1.xpose.msra.mxu0 0.0
        %315 = vmatprep.subr.mxu0 0.0
        %316 = vmatpush1.xpose.msra.mxu0 0.0
        %317 = vmatprep.subr.mxu0 0.0
        %318 = vmatpush1.xpose.msra.mxu0 0.0
        %319 = vmatprep.subr.mxu0 0.0
        %320 = vmatpush1.xpose.msra.mxu0 0.0
        %321 = vmatprep.subr.mxu0 0.0
        %322 = vmatpush1.xpose.msra.mxu0 0.0
        %323 = vmatprep.subr.mxu0 0.0
        %324 = vmatpush1.xpose.msra.mxu0 0.0
        %325 = vmatprep.subr.mxu0 0.0
        %326 = vmatpush1.xpose.msra.mxu0 0.0
        %327 = vmatprep.subr.mxu0 0.0
        %328 = vmatpush1.xpose.msra.mxu0 0.0
        %329 = vmatprep.subr.mxu0 0.0
        %330 = vmatpush1.xpose.msra.mxu0 0.0
        %331 = vmatprep.subr.mxu0 0.0
        %332 = vmatpush1.xpose.msra.mxu0 0.0
        %333 = vmatprep.subr.mxu0 0.0
        %334 = vmatpush1.xpose.msra.mxu0 0.0
        %335 = vmatprep.subr.mxu0 0.0
        %336 = vmatpush1.xpose.msra.mxu0 0.0
        %337 = vmatprep.subr.mxu0 0.0
        %338 = vmatpush1.xpose.msra.mxu0 0.0
        %339 = vmatprep.subr.mxu0 0.0
        %340 = vmatpush1.xpose.msra.mxu0 0.0
        %341 = vmatprep.subr.mxu0 0.0
        %342 = vmatpush1.xpose.msra.mxu0 0.0
        %343 = vmatprep.subr.mxu0 0.0
        %344 = vmatpush1.xpose.msra.mxu0 0.0
        %345 = vmatprep.subr.mxu0 0.0
        %346 = vmatpush1.xpose.msra.mxu0 0.0
        %347 = vmatprep.subr.mxu0 0.0
        %348 = vmatpush1.xpose.msra.mxu0 0.0
        %349 = vmatprep.mubr.f32.mxu0 0.0
        %350 = vmatmul.mubr.f32.gmra.mrb[0].mxu0 %v274
        %v351 = vpop.f32.mrb[0].mxu0
        %v352 = vadd.f32 0.0, %v351
        %v353 = vpop.f32.mrb[0].mxu0
        %354 = vmatprep.mubr.f32.mxu0 0.0
        %355 = vmatmul.mubr.f32.gmra.mrb[0].mxu0 %v277
        %v356 = vpop.f32.mrb[0].mxu0
        %v357 = vadd.f32 0.0, %v356
        %v358 = vpop.f32.mrb[0].mxu0
        %359 = vdwg.mxu0
        %vm360 = vcmp.eq.s32.totalorder %v268, 0
        %vm361 = vcmp.eq.s32.totalorder %v269, 0
        %363 = vset.pattern.permute.xlu0 0
        %364 = vperm.xlu0 %363, %v352
        %v365 = vpop.permute.xlu0 %364
        %368 = vset.pattern.permute.xlu0 0
        %369 = vperm.xlu0 %368, %v357
        %v370 = vpop.permute.xlu0 %369
        %v372 = vsel %vm360, %v365, 0.0
        %v373 = vsel %vm361, %v370, 0.0
        %v374 = vadd.f32 %v372, 0.0
        %v375 = vadd.f32 %v373, 0.0
        %vm376 = vcmp.eq.s32.totalorder %v268, 1
        %vm377 = vcmp.eq.s32.totalorder %v269, 1
        %378 = vset.pattern.permute.xlu0 1
        %379 = vperm.xlu0 %378, %v352
        %v380 = vpop.permute.xlu0 %379
        %382 = vset.pattern.permute.xlu0 1
        %383 = vperm.xlu0 %382, %v357
        %v384 = vpop.permute.xlu0 %383
        %v386 = vsel %vm376, %v380, 0.0
        %v387 = vsel %vm377, %v384, 0.0
        %v388 = vadd.f32 %v374, %v386
        %v389 = vadd.f32 %v375, %v387
        %vm390 = vcmp.eq.s32.totalorder %v268, 2
        %vm391 = vcmp.eq.s32.totalorder %v269, 2
        %392 = vset.pattern.permute.xlu0 2
        %393 = vperm.xlu0 %392, %v352
        %v394 = vpop.permute.xlu0 %393
        %396 = vset.pattern.permute.xlu0 2
        %397 = vperm.xlu0 %396, %v357
        %v398 = vpop.permute.xlu0 %397
        %v400 = vsel %vm390, %v394, 0.0
        %v401 = vsel %vm391, %v398, 0.0
        %v402 = vadd.f32 %v388, %v400
        %v403 = vadd.f32 %v389, %v401
        %vm404 = vcmp.eq.s32.totalorder %v268, 3
        %vm405 = vcmp.eq.s32.totalorder %v269, 3
        %406 = vset.pattern.permute.xlu0 3
        %407 = vperm.xlu0 %406, %v352
        %v408 = vpop.permute.xlu0 %407
        %410 = vset.pattern.permute.xlu0 3
        %411 = vperm.xlu0 %410, %v357
        %v412 = vpop.permute.xlu0 %411
        %v414 = vsel %vm404, %v408, 0.0
        %v415 = vsel %vm405, %v412, 0.0
        %v416 = vadd.f32 %v402, %v414
        %v417 = vadd.f32 %v403, %v415
        %vm418 = vcmp.eq.s32.totalorder %v268, 4
        %vm419 = vcmp.eq.s32.totalorder %v269, 4
        %420 = vset.pattern.permute.xlu0 4
        %421 = vperm.xlu0 %420, %v352
        %v422 = vpop.permute.xlu0 %421
        %424 = vset.pattern.permute.xlu0 4
        %425 = vperm.xlu0 %424, %v357
        %v426 = vpop.permute.xlu0 %425
        %v428 = vsel %vm418, %v422, 0.0
        %v429 = vsel %vm419, %v426, 0.0
        %v430 = vadd.f32 %v416, %v428
        %v431 = vadd.f32 %v417, %v429
        %vm432 = vcmp.eq.s32.totalorder %v268, 5
        %vm433 = vcmp.eq.s32.totalorder %v269, 5
        %434 = vset.pattern.permute.xlu0 5
        %435 = vperm.xlu0 %434, %v352
        %v436 = vpop.permute.xlu0 %435
        %438 = vset.pattern.permute.xlu0 5
        %439 = vperm.xlu0 %438, %v357
        %v440 = vpop.permute.xlu0 %439
        %v442 = vsel %vm432, %v436, 0.0
        %v443 = vsel %vm433, %v440, 0.0
        %v444 = vadd.f32 %v430, %v442
        %v445 = vadd.f32 %v431, %v443
        %vm446 = vcmp.eq.s32.totalorder %v268, 6
        %vm447 = vcmp.eq.s32.totalorder %v269, 6
        %448 = vset.pattern.permute.xlu0 6
        %449 = vperm.xlu0 %448, %v352
        %v450 = vpop.permute.xlu0 %449
        %452 = vset.pattern.permute.xlu0 6
        %453 = vperm.xlu0 %452, %v357
        %v454 = vpop.permute.xlu0 %453
        %v456 = vsel %vm446, %v450, 0.0
        %v457 = vsel %vm447, %v454, 0.0
        %v458 = vadd.f32 %v444, %v456
        %v459 = vadd.f32 %v445, %v457
        %vm460 = vcmp.eq.s32.totalorder %v268, 7
        %vm461 = vcmp.eq.s32.totalorder %v269, 7
        %462 = vset.pattern.permute.xlu0 7
        %463 = vperm.xlu0 %462, %v352
        %v464 = vpop.permute.xlu0 %463
        %466 = vset.pattern.permute.xlu0 7
        %467 = vperm.xlu0 %466, %v357
        %v468 = vpop.permute.xlu0 %467
        %v470 = vsel %vm460, %v464, 0.0
        %v471 = vsel %vm461, %v468, 0.0
        %v472 = vadd.f32 %v458, %v470
        %v473 = vadd.f32 %v459, %v471
        %vm474 = vcmp.eq.s32.totalorder %v268, 8
        %vm475 = vcmp.eq.s32.totalorder %v269, 8
        %476 = vset.pattern.permute.xlu0 8
        %477 = vperm.xlu0 %476, %v352
        %v478 = vpop.permute.xlu0 %477
        %480 = vset.pattern.permute.xlu0 8
        %481 = vperm.xlu0 %480, %v357
        %v482 = vpop.permute.xlu0 %481
        %v484 = vsel %vm474, %v478, 0.0
        %v485 = vsel %vm475, %v482, 0.0
        %v486 = vadd.f32 %v472, %v484
        %v487 = vadd.f32 %v473, %v485
        %vm488 = vcmask 130048
        %489 = vst.msk [vmem:[%s262] sm:$0xff] %vm488, %v486
        %490 = vst.msk [vmem:[%s262 + $0x8] sm:$0xff] %vm488, %v487
        %s491 = scalar_lea.vmem %s222, 16 [#allocation2]
        %v492 = vld [vmem:[%s491] sm:$0xff]
        %v493 = vld [vmem:[%s491 + $0x8] sm:$0xff]
        %v495 = vsel %vm272, %v492, 0
        %v498 = vsel %vm272, %v493, 0
        %500 = vmatprep.subr.mxu0 0.0
        %501 = vmatpush1.xpose.msra.mxu0 %v280
        %502 = vmatprep.subr.mxu0 0.0
        %503 = vmatpush1.xpose.msra.mxu0 %v283
        %504 = vmatprep.subr.mxu0 0.0
        %505 = vmatpush1.xpose.msra.mxu0 0.0
        %506 = vmatprep.subr.mxu0 0.0
        %507 = vmatpush1.xpose.msra.mxu0 0.0
        %508 = vmatprep.subr.mxu0 0.0
        %509 = vmatpush1.xpose.msra.mxu0 0.0
        %510 = vmatprep.subr.mxu0 0.0
        %511 = vmatpush1.xpose.msra.mxu0 0.0
        %512 = vmatprep.subr.mxu0 0.0
        %513 = vmatpush1.xpose.msra.mxu0 0.0
        %514 = vmatprep.subr.mxu0 0.0
        %515 = vmatpush1.xpose.msra.mxu0 0.0
        %516 = vmatprep.subr.mxu0 0.0
        %517 = vmatpush1.xpose.msra.mxu0 0.0
        %518 = vmatprep.subr.mxu0 0.0
        %519 = vmatpush1.xpose.msra.mxu0 0.0
        %520 = vmatprep.subr.mxu0 0.0
        %521 = vmatpush1.xpose.msra.mxu0 0.0
        %522 = vmatprep.subr.mxu0 0.0
        %523 = vmatpush1.xpose.msra.mxu0 0.0
        %524 = vmatprep.subr.mxu0 0.0
        %525 = vmatpush1.xpose.msra.mxu0 0.0
        %526 = vmatprep.subr.mxu0 0.0
        %527 = vmatpush1.xpose.msra.mxu0 0.0
        %528 = vmatprep.subr.mxu0 0.0
        %529 = vmatpush1.xpose.msra.mxu0 0.0
        %530 = vmatprep.subr.mxu0 0.0
        %531 = vmatpush1.xpose.msra.mxu0 0.0
        %532 = vmatprep.subr.mxu0 0.0
        %533 = vmatpush1.xpose.msra.mxu0 0.0
        %534 = vmatprep.subr.mxu0 0.0
        %535 = vmatpush1.xpose.msra.mxu0 0.0
        %536 = vmatprep.subr.mxu0 0.0
        %537 = vmatpush1.xpose.msra.mxu0 0.0
        %538 = vmatprep.subr.mxu0 0.0
        %539 = vmatpush1.xpose.msra.mxu0 0.0
        %540 = vmatprep.subr.mxu0 0.0
        %541 = vmatpush1.xpose.msra.mxu0 0.0
        %542 = vmatprep.subr.mxu0 0.0
        %543 = vmatpush1.xpose.msra.mxu0 0.0
        %544 = vmatprep.subr.mxu0 0.0
        %545 = vmatpush1.xpose.msra.mxu0 0.0
        %546 = vmatprep.subr.mxu0 0.0
        %547 = vmatpush1.xpose.msra.mxu0 0.0
        %548 = vmatprep.subr.mxu0 0.0
        %549 = vmatpush1.xpose.msra.mxu0 0.0
        %550 = vmatprep.subr.mxu0 0.0
        %551 = vmatpush1.xpose.msra.mxu0 0.0
        %552 = vmatprep.subr.mxu0 0.0
        %553 = vmatpush1.xpose.msra.mxu0 0.0
        %554 = vmatprep.subr.mxu0 0.0
        %555 = vmatpush1.xpose.msra.mxu0 0.0
        %556 = vmatprep.subr.mxu0 0.0
        %557 = vmatpush1.xpose.msra.mxu0 0.0
        %558 = vmatprep.subr.mxu0 0.0
        %559 = vmatpush1.xpose.msra.mxu0 0.0
        %560 = vmatprep.subr.mxu0 0.0
        %561 = vmatpush1.xpose.msra.mxu0 0.0
        %562 = vmatprep.subr.mxu0 0.0
        %563 = vmatpush1.xpose.msra.mxu0 0.0
        %564 = vmatprep.mubr.f32.mxu0 0.0
        %565 = vmatmul.mubr.f32.gmra.mrb[0].mxu0 %v495
        %v566 = vpop.f32.mrb[0].mxu0
        %v567 = vadd.f32 0.0, %v566
        %v568 = vpop.f32.mrb[0].mxu0
        %569 = vmatprep.mubr.f32.mxu0 0.0
        %570 = vmatmul.mubr.f32.gmra.mrb[0].mxu0 %v498
        %v571 = vpop.f32.mrb[0].mxu0
        %v572 = vadd.f32 0.0, %v571
        %v573 = vpop.f32.mrb[0].mxu0
        %574 = vdwg.mxu0
        %576 = vset.pattern.permute.xlu0 0
        %577 = vperm.xlu0 %576, %v567
        %v578 = vpop.permute.xlu0 %577
        %581 = vset.pattern.permute.xlu0 0
        %582 = vperm.xlu0 %581, %v572
        %v583 = vpop.permute.xlu0 %582
        %v585 = vsel %vm360, %v578, 0.0
        %v586 = vsel %vm361, %v583, 0.0
        %v587 = vadd.f32 %v585, 0.0
        %v588 = vadd.f32 %v586, 0.0
        %589 = vset.pattern.permute.xlu0 1
        %590 = vperm.xlu0 %589, %v567
        %v591 = vpop.permute.xlu0 %590
        %593 = vset.pattern.permute.xlu0 1
        %594 = vperm.xlu0 %593, %v572
        %v595 = vpop.permute.xlu0 %594
        %v597 = vsel %vm376, %v591, 0.0
        %v598 = vsel %vm377, %v595, 0.0
        %v599 = vadd.f32 %v587, %v597
        %v600 = vadd.f32 %v588, %v598
        %601 = vset.pattern.permute.xlu0 2
        %602 = vperm.xlu0 %601, %v567
        %v603 = vpop.permute.xlu0 %602
        %605 = vset.pattern.permute.xlu0 2
        %606 = vperm.xlu0 %605, %v572
        %v607 = vpop.permute.xlu0 %606
        %v609 = vsel %vm390, %v603, 0.0
        %v610 = vsel %vm391, %v607, 0.0
        %v611 = vadd.f32 %v599, %v609
        %v612 = vadd.f32 %v600, %v610
        %613 = vset.pattern.permute.xlu0 3
        %614 = vperm.xlu0 %613, %v567
        %v615 = vpop.permute.xlu0 %614
        %617 = vset.pattern.permute.xlu0 3
        %618 = vperm.xlu0 %617, %v572
        %v619 = vpop.permute.xlu0 %618
        %v621 = vsel %vm404, %v615, 0.0
        %v622 = vsel %vm405, %v619, 0.0
        %v623 = vadd.f32 %v611, %v621
        %v624 = vadd.f32 %v612, %v622
        %625 = vset.pattern.permute.xlu0 4
        %626 = vperm.xlu0 %625, %v567
        %v627 = vpop.permute.xlu0 %626
        %629 = vset.pattern.permute.xlu0 4
        %630 = vperm.xlu0 %629, %v572
        %v631 = vpop.permute.xlu0 %630
        %v633 = vsel %vm418, %v627, 0.0
        %v634 = vsel %vm419, %v631, 0.0
        %v635 = vadd.f32 %v623, %v633
        %v636 = vadd.f32 %v624, %v634
        %637 = vset.pattern.permute.xlu0 5
        %638 = vperm.xlu0 %637, %v567
        %v639 = vpop.permute.xlu0 %638
        %641 = vset.pattern.permute.xlu0 5
        %642 = vperm.xlu0 %641, %v572
        %v643 = vpop.permute.xlu0 %642
        %v645 = vsel %vm432, %v639, 0.0
        %v646 = vsel %vm433, %v643, 0.0
        %v647 = vadd.f32 %v635, %v645
        %v648 = vadd.f32 %v636, %v646
        %649 = vset.pattern.permute.xlu0 6
        %650 = vperm.xlu0 %649, %v567
        %v651 = vpop.permute.xlu0 %650
        %653 = vset.pattern.permute.xlu0 6
        %654 = vperm.xlu0 %653, %v572
        %v655 = vpop.permute.xlu0 %654
        %v657 = vsel %vm446, %v651, 0.0
        %v658 = vsel %vm447, %v655, 0.0
        %v659 = vadd.f32 %v647, %v657
        %v660 = vadd.f32 %v648, %v658
        %661 = vset.pattern.permute.xlu0 7
        %662 = vperm.xlu0 %661, %v567
        %v663 = vpop.permute.xlu0 %662
        %665 = vset.pattern.permute.xlu0 7
        %666 = vperm.xlu0 %665, %v572
        %v667 = vpop.permute.xlu0 %666
        %v669 = vsel %vm460, %v663, 0.0
        %v670 = vsel %vm461, %v667, 0.0
        %v671 = vadd.f32 %v659, %v669
        %v672 = vadd.f32 %v660, %v670
        %673 = vset.pattern.permute.xlu0 8
        %674 = vperm.xlu0 %673, %v567
        %v675 = vpop.permute.xlu0 %674
        %677 = vset.pattern.permute.xlu0 8
        %678 = vperm.xlu0 %677, %v572
        %v679 = vpop.permute.xlu0 %678
        %v681 = vsel %vm474, %v675, 0.0
        %v682 = vsel %vm475, %v679, 0.0
        %v683 = vadd.f32 %v671, %v681
        %v684 = vadd.f32 %v672, %v682
        %s685 = scalar_lea.vmem %s262, 16 [#allocation8]
        %686 = vst.msk [vmem:[%s685] sm:$0xff] %vm488, %v683
        %687 = vst.msk [vmem:[%s685 + $0x8] sm:$0xff] %vm488, %v684
        %s688 = scalar_lea.vmem %s222, 32 [#allocation2]
        %v689 = vld [vmem:[%s688] sm:$0xff]
        %v690 = vld [vmem:[%s688 + $0x8] sm:$0xff]
        %v692 = vsel %vm272, %v689, 0
        %v695 = vsel %vm272, %v690, 0
        %697 = vmatprep.subr.mxu0 0.0
        %698 = vmatpush1.xpose.msra.mxu0 %v280
        %699 = vmatprep.subr.mxu0 0.0
        %700 = vmatpush1.xpose.msra.mxu0 %v283
        %701 = vmatprep.subr.mxu0 0.0
        %702 = vmatpush1.xpose.msra.mxu0 0.0
        %703 = vmatprep.subr.mxu0 0.0
        %704 = vmatpush1.xpose.msra.mxu0 0.0
        %705 = vmatprep.subr.mxu0 0.0
        %706 = vmatpush1.xpose.msra.mxu0 0.0
        %707 = vmatprep.subr.mxu0 0.0
        %708 = vmatpush1.xpose.msra.mxu0 0.0
        %709 = vmatprep.subr.mxu0 0.0
        %710 = vmatpush1.xpose.msra.mxu0 0.0
        %711 = vmatprep.subr.mxu0 0.0
        %712 = vmatpush1.xpose.msra.mxu0 0.0
        %713 = vmatprep.subr.mxu0 0.0
        %714 = vmatpush1.xpose.msra.mxu0 0.0
        %715 = vmatprep.subr.mxu0 0.0
        %716 = vmatpush1.xpose.msra.mxu0 0.0
        %717 = vmatprep.subr.mxu0 0.0
        %718 = vmatpush1.xpose.msra.mxu0 0.0
        %719 = vmatprep.subr.mxu0 0.0
        %720 = vmatpush1.xpose.msra.mxu0 0.0
        %721 = vmatprep.subr.mxu0 0.0
        %722 = vmatpush1.xpose.msra.mxu0 0.0
        %723 = vmatprep.subr.mxu0 0.0
        %724 = vmatpush1.xpose.msra.mxu0 0.0
        %725 = vmatprep.subr.mxu0 0.0
        %726 = vmatpush1.xpose.msra.mxu0 0.0
        %727 = vmatprep.subr.mxu0 0.0
        %728 = vmatpush1.xpose.msra.mxu0 0.0
        %729 = vmatprep.subr.mxu0 0.0
        %730 = vmatpush1.xpose.msra.mxu0 0.0
        %731 = vmatprep.subr.mxu0 0.0
        %732 = vmatpush1.xpose.msra.mxu0 0.0
        %733 = vmatprep.subr.mxu0 0.0
        %734 = vmatpush1.xpose.msra.mxu0 0.0
        %735 = vmatprep.subr.mxu0 0.0
        %736 = vmatpush1.xpose.msra.mxu0 0.0
        %737 = vmatprep.subr.mxu0 0.0
        %738 = vmatpush1.xpose.msra.mxu0 0.0
        %739 = vmatprep.subr.mxu0 0.0
        %740 = vmatpush1.xpose.msra.mxu0 0.0
        %741 = vmatprep.subr.mxu0 0.0
        %742 = vmatpush1.xpose.msra.mxu0 0.0
        %743 = vmatprep.subr.mxu0 0.0
        %744 = vmatpush1.xpose.msra.mxu0 0.0
        %745 = vmatprep.subr.mxu0 0.0
        %746 = vmatpush1.xpose.msra.mxu0 0.0
        %747 = vmatprep.subr.mxu0 0.0
        %748 = vmatpush1.xpose.msra.mxu0 0.0
        %749 = vmatprep.subr.mxu0 0.0
        %750 = vmatpush1.xpose.msra.mxu0 0.0
        %751 = vmatprep.subr.mxu0 0.0
        %752 = vmatpush1.xpose.msra.mxu0 0.0
        %753 = vmatprep.subr.mxu0 0.0
        %754 = vmatpush1.xpose.msra.mxu0 0.0
        %755 = vmatprep.subr.mxu0 0.0
        %756 = vmatpush1.xpose.msra.mxu0 0.0
        %757 = vmatprep.subr.mxu0 0.0
        %758 = vmatpush1.xpose.msra.mxu0 0.0
        %759 = vmatprep.subr.mxu0 0.0
        %760 = vmatpush1.xpose.msra.mxu0 0.0
        %761 = vmatprep.mubr.f32.mxu0 0.0
        %762 = vmatmul.mubr.f32.gmra.mrb[0].mxu0 %v692
        %v763 = vpop.f32.mrb[0].mxu0
        %v764 = vadd.f32 0.0, %v763
        %v765 = vpop.f32.mrb[0].mxu0
        %766 = vmatprep.mubr.f32.mxu0 0.0
        %767 = vmatmul.mubr.f32.gmra.mrb[0].mxu0 %v695
        %v768 = vpop.f32.mrb[0].mxu0
        %v769 = vadd.f32 0.0, %v768
        %v770 = vpop.f32.mrb[0].mxu0
        %771 = vdwg.mxu0
        %773 = vset.pattern.permute.xlu0 0
        %774 = vperm.xlu0 %773, %v764
        %v775 = vpop.permute.xlu0 %774
        %778 = vset.pattern.permute.xlu0 0
        %779 = vperm.xlu0 %778, %v769
        %v780 = vpop.permute.xlu0 %779
        %v782 = vsel %vm360, %v775, 0.0
        %v783 = vsel %vm361, %v780, 0.0
        %v784 = vadd.f32 %v782, 0.0
        %v785 = vadd.f32 %v783, 0.0
        %786 = vset.pattern.permute.xlu0 1
        %787 = vperm.xlu0 %786, %v764
        %v788 = vpop.permute.xlu0 %787
        %790 = vset.pattern.permute.xlu0 1
        %791 = vperm.xlu0 %790, %v769
        %v792 = vpop.permute.xlu0 %791
        %v794 = vsel %vm376, %v788, 0.0
        %v795 = vsel %vm377, %v792, 0.0
        %v796 = vadd.f32 %v784, %v794
        %v797 = vadd.f32 %v785, %v795
        %798 = vset.pattern.permute.xlu0 2
        %799 = vperm.xlu0 %798, %v764
        %v800 = vpop.permute.xlu0 %799
        %802 = vset.pattern.permute.xlu0 2
        %803 = vperm.xlu0 %802, %v769
        %v804 = vpop.permute.xlu0 %803
        %v806 = vsel %vm390, %v800, 0.0
        %v807 = vsel %vm391, %v804, 0.0
        %v808 = vadd.f32 %v796, %v806
        %v809 = vadd.f32 %v797, %v807
        %810 = vset.pattern.permute.xlu0 3
        %811 = vperm.xlu0 %810, %v764
        %v812 = vpop.permute.xlu0 %811
        %814 = vset.pattern.permute.xlu0 3
        %815 = vperm.xlu0 %814, %v769
        %v816 = vpop.permute.xlu0 %815
        %v818 = vsel %vm404, %v812, 0.0
        %v819 = vsel %vm405, %v816, 0.0
        %v820 = vadd.f32 %v808, %v818
        %v821 = vadd.f32 %v809, %v819
        %822 = vset.pattern.permute.xlu0 4
        %823 = vperm.xlu0 %822, %v764
        %v824 = vpop.permute.xlu0 %823
        %826 = vset.pattern.permute.xlu0 4
        %827 = vperm.xlu0 %826, %v769
        %v828 = vpop.permute.xlu0 %827
        %v830 = vsel %vm418, %v824, 0.0
        %v831 = vsel %vm419, %v828, 0.0
        %v832 = vadd.f32 %v820, %v830
        %v833 = vadd.f32 %v821, %v831
        %834 = vset.pattern.permute.xlu0 5
        %835 = vperm.xlu0 %834, %v764
        %v836 = vpop.permute.xlu0 %835
        %838 = vset.pattern.permute.xlu0 5
        %839 = vperm.xlu0 %838, %v769
        %v840 = vpop.permute.xlu0 %839
        %v842 = vsel %vm432, %v836, 0.0
        %v843 = vsel %vm433, %v840, 0.0
        %v844 = vadd.f32 %v832, %v842
        %v845 = vadd.f32 %v833, %v843
        %846 = vset.pattern.permute.xlu0 6
        %847 = vperm.xlu0 %846, %v764
        %v848 = vpop.permute.xlu0 %847
        %850 = vset.pattern.permute.xlu0 6
        %851 = vperm.xlu0 %850, %v769
        %v852 = vpop.permute.xlu0 %851
        %v854 = vsel %vm446, %v848, 0.0
        %v855 = vsel %vm447, %v852, 0.0
        %v856 = vadd.f32 %v844, %v854
        %v857 = vadd.f32 %v845, %v855
        %858 = vset.pattern.permute.xlu0 7
        %859 = vperm.xlu0 %858, %v764
        %v860 = vpop.permute.xlu0 %859
        %862 = vset.pattern.permute.xlu0 7
        %863 = vperm.xlu0 %862, %v769
        %v864 = vpop.permute.xlu0 %863
        %v866 = vsel %vm460, %v860, 0.0
        %v867 = vsel %vm461, %v864, 0.0
        %v868 = vadd.f32 %v856, %v866
        %v869 = vadd.f32 %v857, %v867
        %870 = vset.pattern.permute.xlu0 8
        %871 = vperm.xlu0 %870, %v764
        %v872 = vpop.permute.xlu0 %871
        %874 = vset.pattern.permute.xlu0 8
        %875 = vperm.xlu0 %874, %v769
        %v876 = vpop.permute.xlu0 %875
        %v878 = vsel %vm474, %v872, 0.0
        %v879 = vsel %vm475, %v876, 0.0
        %v880 = vadd.f32 %v868, %v878
        %v881 = vadd.f32 %v869, %v879
        %s882 = scalar_lea.vmem %s262, 32 [#allocation8]
        %883 = vst.msk [vmem:[%s882] sm:$0xff] %vm488, %v880
        %884 = vst.msk [vmem:[%s882 + $0x8] sm:$0xff] %vm488, %v881
        %s885 = scalar_lea.vmem %s222, 48 [#allocation2]
        %v886 = vld [vmem:[%s885] sm:$0xff]
        %v887 = vld [vmem:[%s885 + $0x8] sm:$0xff]
        %v889 = vsel %vm272, %v886, 0
        %v892 = vsel %vm272, %v887, 0
        %894 = vmatprep.subr.mxu0 0.0
        %895 = vmatpush1.xpose.msra.mxu0 %v280
        %896 = vmatprep.subr.mxu0 0.0
        %897 = vmatpush1.xpose.msra.mxu0 %v283
        %898 = vmatprep.subr.mxu0 0.0
        %899 = vmatpush1.xpose.msra.mxu0 0.0
        %900 = vmatprep.subr.mxu0 0.0
        %901 = vmatpush1.xpose.msra.mxu0 0.0
        %902 = vmatprep.subr.mxu0 0.0
        %903 = vmatpush1.xpose.msra.mxu0 0.0
        %904 = vmatprep.subr.mxu0 0.0
        %905 = vmatpush1.xpose.msra.mxu0 0.0
        %906 = vmatprep.subr.mxu0 0.0
        %907 = vmatpush1.xpose.msra.mxu0 0.0
        %908 = vmatprep.subr.mxu0 0.0
        %909 = vmatpush1.xpose.msra.mxu0 0.0
        %910 = vmatprep.subr.mxu0 0.0
        %911 = vmatpush1.xpose.msra.mxu0 0.0
        %912 = vmatprep.subr.mxu0 0.0
        %913 = vmatpush1.xpose.msra.mxu0 0.0
        %914 = vmatprep.subr.mxu0 0.0
        %915 = vmatpush1.xpose.msra.mxu0 0.0
        %916 = vmatprep.subr.mxu0 0.0
        %917 = vmatpush1.xpose.msra.mxu0 0.0
        %918 = vmatprep.subr.mxu0 0.0
        %919 = vmatpush1.xpose.msra.mxu0 0.0
        %920 = vmatprep.subr.mxu0 0.0
        %921 = vmatpush1.xpose.msra.mxu0 0.0
        %922 = vmatprep.subr.mxu0 0.0
        %923 = vmatpush1.xpose.msra.mxu0 0.0
        %924 = vmatprep.subr.mxu0 0.0
        %925 = vmatpush1.xpose.msra.mxu0 0.0
        %926 = vmatprep.subr.mxu0 0.0
        %927 = vmatpush1.xpose.msra.mxu0 0.0
        %928 = vmatprep.subr.mxu0 0.0
        %929 = vmatpush1.xpose.msra.mxu0 0.0
        %930 = vmatprep.subr.mxu0 0.0
        %931 = vmatpush1.xpose.msra.mxu0 0.0
        %932 = vmatprep.subr.mxu0 0.0
        %933 = vmatpush1.xpose.msra.mxu0 0.0
        %934 = vmatprep.subr.mxu0 0.0
        %935 = vmatpush1.xpose.msra.mxu0 0.0
        %936 = vmatprep.subr.mxu0 0.0
        %937 = vmatpush1.xpose.msra.mxu0 0.0
        %938 = vmatprep.subr.mxu0 0.0
        %939 = vmatpush1.xpose.msra.mxu0 0.0
        %940 = vmatprep.subr.mxu0 0.0
        %941 = vmatpush1.xpose.msra.mxu0 0.0
        %942 = vmatprep.subr.mxu0 0.0
        %943 = vmatpush1.xpose.msra.mxu0 0.0
        %944 = vmatprep.subr.mxu0 0.0
        %945 = vmatpush1.xpose.msra.mxu0 0.0
        %946 = vmatprep.subr.mxu0 0.0
        %947 = vmatpush1.xpose.msra.mxu0 0.0
        %948 = vmatprep.subr.mxu0 0.0
        %949 = vmatpush1.xpose.msra.mxu0 0.0
        %950 = vmatprep.subr.mxu0 0.0
        %951 = vmatpush1.xpose.msra.mxu0 0.0
        %952 = vmatprep.subr.mxu0 0.0
        %953 = vmatpush1.xpose.msra.mxu0 0.0
        %954 = vmatprep.subr.mxu0 0.0
        %955 = vmatpush1.xpose.msra.mxu0 0.0
        %956 = vmatprep.subr.mxu0 0.0
        %957 = vmatpush1.xpose.msra.mxu0 0.0
        %958 = vmatprep.mubr.f32.mxu0 0.0
        %959 = vmatmul.mubr.f32.gmra.mrb[0].mxu0 %v889
        %v960 = vpop.f32.mrb[0].mxu0
        %v961 = vadd.f32 0.0, %v960
        %v962 = vpop.f32.mrb[0].mxu0
        %963 = vmatprep.mubr.f32.mxu0 0.0
        %964 = vmatmul.mubr.f32.gmra.mrb[0].mxu0 %v892
        %v965 = vpop.f32.mrb[0].mxu0
        %v966 = vadd.f32 0.0, %v965
        %v967 = vpop.f32.mrb[0].mxu0
        %968 = vdwg.mxu0
        %970 = vset.pattern.permute.xlu0 0
        %971 = vperm.xlu0 %970, %v961
        %v972 = vpop.permute.xlu0 %971
        %975 = vset.pattern.permute.xlu0 0
        %976 = vperm.xlu0 %975, %v966
        %v977 = vpop.permute.xlu0 %976
        %v979 = vsel %vm360, %v972, 0.0
        %v980 = vsel %vm361, %v977, 0.0
        %v981 = vadd.f32 %v979, 0.0
        %v982 = vadd.f32 %v980, 0.0
        %983 = vset.pattern.permute.xlu0 1
        %984 = vperm.xlu0 %983, %v961
        %v985 = vpop.permute.xlu0 %984
        %987 = vset.pattern.permute.xlu0 1
        %988 = vperm.xlu0 %987, %v966
        %v989 = vpop.permute.xlu0 %988
        %v991 = vsel %vm376, %v985, 0.0
        %v992 = vsel %vm377, %v989, 0.0
        %v993 = vadd.f32 %v981, %v991
        %v994 = vadd.f32 %v982, %v992
        %995 = vset.pattern.permute.xlu0 2
        %996 = vperm.xlu0 %995, %v961
        %v997 = vpop.permute.xlu0 %996
        %999 = vset.pattern.permute.xlu0 2
        %1000 = vperm.xlu0 %999, %v966
        %v1001 = vpop.permute.xlu0 %1000
        %v1003 = vsel %vm390, %v997, 0.0
        %v1004 = vsel %vm391, %v1001, 0.0
        %v1005 = vadd.f32 %v993, %v1003
        %v1006 = vadd.f32 %v994, %v1004
        %1007 = vset.pattern.permute.xlu0 3
        %1008 = vperm.xlu0 %1007, %v961
        %v1009 = vpop.permute.xlu0 %1008
        %1011 = vset.pattern.permute.xlu0 3
        %1012 = vperm.xlu0 %1011, %v966
        %v1013 = vpop.permute.xlu0 %1012
        %v1015 = vsel %vm404, %v1009, 0.0
        %v1016 = vsel %vm405, %v1013, 0.0
        %v1017 = vadd.f32 %v1005, %v1015
        %v1018 = vadd.f32 %v1006, %v1016
        %1019 = vset.pattern.permute.xlu0 4
        %1020 = vperm.xlu0 %1019, %v961
        %v1021 = vpop.permute.xlu0 %1020
        %1023 = vset.pattern.permute.xlu0 4
        %1024 = vperm.xlu0 %1023, %v966
        %v1025 = vpop.permute.xlu0 %1024
        %v1027 = vsel %vm418, %v1021, 0.0
        %v1028 = vsel %vm419, %v1025, 0.0
        %v1029 = vadd.f32 %v1017, %v1027
        %v1030 = vadd.f32 %v1018, %v1028
        %1031 = vset.pattern.permute.xlu0 5
        %1032 = vperm.xlu0 %1031, %v961
        %v1033 = vpop.permute.xlu0 %1032
        %1035 = vset.pattern.permute.xlu0 5
        %1036 = vperm.xlu0 %1035, %v966
        %v1037 = vpop.permute.xlu0 %1036
        %v1039 = vsel %vm432, %v1033, 0.0
        %v1040 = vsel %vm433, %v1037, 0.0
        %v1041 = vadd.f32 %v1029, %v1039
        %v1042 = vadd.f32 %v1030, %v1040
        %1043 = vset.pattern.permute.xlu0 6
        %1044 = vperm.xlu0 %1043, %v961
        %v1045 = vpop.permute.xlu0 %1044
        %1047 = vset.pattern.permute.xlu0 6
        %1048 = vperm.xlu0 %1047, %v966
        %v1049 = vpop.permute.xlu0 %1048
        %v1051 = vsel %vm446, %v1045, 0.0
        %v1052 = vsel %vm447, %v1049, 0.0
        %v1053 = vadd.f32 %v1041, %v1051
        %v1054 = vadd.f32 %v1042, %v1052
        %1055 = vset.pattern.permute.xlu0 7
        %1056 = vperm.xlu0 %1055, %v961
        %v1057 = vpop.permute.xlu0 %1056
        %1059 = vset.pattern.permute.xlu0 7
        %1060 = vperm.xlu0 %1059, %v966
        %v1061 = vpop.permute.xlu0 %1060
        %v1063 = vsel %vm460, %v1057, 0.0
        %v1064 = vsel %vm461, %v1061, 0.0
        %v1065 = vadd.f32 %v1053, %v1063
        %v1066 = vadd.f32 %v1054, %v1064
        %1067 = vset.pattern.permute.xlu0 8
        %1068 = vperm.xlu0 %1067, %v961
        %v1069 = vpop.permute.xlu0 %1068
        %1071 = vset.pattern.permute.xlu0 8
        %1072 = vperm.xlu0 %1071, %v966
        %v1073 = vpop.permute.xlu0 %1072
        %v1075 = vsel %vm474, %v1069, 0.0
        %v1076 = vsel %vm475, %v1073, 0.0
        %v1077 = vadd.f32 %v1065, %v1075
        %v1078 = vadd.f32 %v1066, %v1076
        %s1079 = scalar_lea.vmem %s262, 48 [#allocation8]
        %1080 = vst.msk [vmem:[%s1079] sm:$0xff] %vm488, %v1077
        %1081 = vst.msk [vmem:[%s1079 + $0x8] sm:$0xff] %vm488, %v1078
        %s1082 = sand.u32 %s120, 1
        %s1083 = scalar_lea.sflag [#allocation4], %s1082
        %s1084 = sand.u32 %s120, 1
        %s1085 = smul.addr %s1084, 64
        %s1086 = scalar_lea.vmem [#allocation8], %s1085
        // Predicated region
        $region45: #{tpu_custom_call.1} parent=31 // pred_check
          %p1087 = pneg %p130
        $region46: #{tpu_custom_call.1} parent=31 // pred_check_branch
          %1089 = sbr.rel (%p1087) target = $region48
        $region47: #{tpu_custom_call.1} parent=31 // pred_region
          %s1090 = smul.u32 2, %s26
          %s1092 = ssub.s32 1024, 1024
          %1093 = vsyncadd %s1083, %s1092
          %s1094 = smul.addr %s25, 8
          %s1095 = sadd.s32 %s1090, %s1094
          %s1096 = smul.addr %s1095, 128
          %s1097 = scalar_lea.hbm %s3, %s1096
          %s1098 = sshll.u32 %s1086, 4
          %s1099 = int_to_ptr.vmem [resolvable:$true] %s1098
          %1104 = dma.vmem_to_hbm [thread:$0]  %s1099, 1024, %s1097, %s1083, 128, 128, 8
        $region48: #{tpu_custom_call.1} parent=31 // pred_fallthru
          _
      $region32: #{tpu_custom_call.1} parent=5 // pred_fallthru
        _
      %p1105 = scmp.le.s32.totalorder 2, %s16
      // Predicated region
      $region49: #{tpu_custom_call.1} parent=5 // pred_check
        %p1106 = pneg %p1105
      $region50: #{tpu_custom_call.1} parent=5 // pred_check_branch
        %1108 = sbr.rel (%p1106) target = $region52
      $region51: #{tpu_custom_call.1} parent=5 // pred_region
        %s1109 = ssub.s32 %s16, 2
        // Predicated region
        $region53: #{tpu_custom_call.1} parent=51 // pred_check
          %p1110 = pneg %p136
        $region54: #{tpu_custom_call.1} parent=51 // pred_check_branch
          %1112 = sbr.rel (%p1110) target = $region56
        $region55: #{tpu_custom_call.1} parent=51 // pred_region
          %s1113 = sand.u32 %s121, 1
          %s1114 = scalar_lea.sflag [#allocation4], %s1113
          %s1115 = sand.u32 %s121, 1
          %s1116 = smul.addr %s1115, 64
          %s1117 = scalar_lea.vmem [#allocation8], %s1116
          %1118 = dma.done %s1114, 1024
        $region56: #{tpu_custom_call.1} parent=51 // pred_fallthru
          _
      $region52: #{tpu_custom_call.1} parent=5 // pred_fallthru
        _
    $region6: #{tpu_custom_call.1} parent=1 // loop_footer
      %s20 = sadd.s32 1, %s16
    $region7: #{tpu_custom_call.1} parent=1 // loop_footer_branch
      %15 = sbr.rel target = $region3
    $region8: #{tpu_custom_call.1} parent=1 // loop_exit
      _
    %1119 = vsyncpa [#allocation3], 1
    %s1120 = scalar_lea.sflag [#allocation3], 1
    %1121 = vsyncpa %s1120, 1
    %1122 = vsyncpa [#allocation6], 1
    %1123 = vsyncpa [#allocation4], 1
    %s1124 = scalar_lea.sflag [#allocation4], 1
    %1125 = vsyncpa %s1124, 1

</llo_original>
